<compile_context>
chip_gen: v6e
topology: v6e:2x2x1
jax: 0.10.0
libtpu: 0.0.40
codegen_flags: <defaults>
</compile_context>

<pallas_src>
import functools

import jax
import jax.numpy as jnp
from jax import lax
from jax.experimental import pallas as pl
from jax.experimental.pallas import tpu as pltpu


# ------------------------------- fused kernel ------------------------------ #

def fused_net_kernel(x_ref, m1_ref, m2_ref, b1_ref, b2_ref,
                     wf1a_ref, wf1b_ref, bf1_ref,
                     wf2_ref, bf2_ref, wf3_ref, bf3_ref, o_ref):
    """Whole forward pass for a small block of images, entirely in VMEM.

    x_ref   : (TB, 2, 8, 48)  image rows parity-deinterleaved; lanes = w*3 + c
    m1_ref  : (3, 48, 256)    banded conv1 weights; cols = b*128 + j*16 + o
    m2_ref  : (3, 128, 256)   banded conv2 weights; cols = b2*128 + j2*32 + o2
    o_ref   : (TB, 1, 10)     softmax probabilities
    """
    tb = x_ref.shape[0]
    for t in range(tb):                      # images are independent; unrolled
        xi = x_ref[t]                        # (2, 8, 48) -- one load per image

        # ---- conv1 (banded matmuls per output-row parity) + fused 2x2 pool ----
        def conv1_rows(out_parity):
            acc = None
            for di in range(3):
                q = out_parity + di                      # input row = 2*r + q
                rows = xi[q % 2, q // 2:q // 2 + 7, :]              # (7, 48)
                part = jnp.dot(rows, m1_ref[di],
                               preferred_element_type=jnp.float32)  # (7, 256)
                acc = part if acc is None else acc + part
            return acc

        y_even = conv1_rows(0)                           # conv1 rows 0,2,...,12
        y_odd = conv1_rows(1)                            # conv1 rows 1,3,...,13
        ym = jnp.maximum(y_even, y_odd)                  # pool over H
        p1 = jnp.maximum(ym[:, 0:128], ym[:, 128:256])   # pool over W  (7, 128)
        p1 = jnp.maximum(p1 + b1_ref[...], 0.0)          # conv1 bias + relu

        # ---- conv2 (banded matmuls) + fused 2x2 pool ----
        acc2 = None
        for di in range(3):
            part = jnp.dot(p1[di:di + 4, :], m2_ref[di],
                           preferred_element_type=jnp.float32)      # (4, 256)
            acc2 = part if acc2 is None else acc2 + part
        top = jnp.maximum(acc2[0:1, :], acc2[1:2, :])    # pool rows (0, 1)
        bot = jnp.maximum(acc2[2:3, :], acc2[3:4, :])    # pool rows (2, 3)
        top = jnp.maximum(top[:, 0:128], top[:, 128:256])  # pool over W (1,128)
        bot = jnp.maximum(bot[:, 0:128], bot[:, 128:256])
        top = jnp.maximum(top + b2_ref[...], 0.0)        # conv2 bias + relu
        bot = jnp.maximum(bot + b2_ref[...], 0.0)

        # ---- fc1 (split over the two pooled rows), fc2, fc3 ----
        z1 = (jnp.dot(top, wf1a_ref[...], preferred_element_type=jnp.float32)
              + jnp.dot(bot, wf1b_ref[...], preferred_element_type=jnp.float32)
              + bf1_ref[...])
        h1 = jnp.maximum(z1, 0.0)                                    # (1, 128)
        h2 = jnp.maximum(
            jnp.dot(h1, wf2_ref[...], preferred_element_type=jnp.float32)
            + bf2_ref[...], 0.0)                                     # (1, 64)
        logits = (jnp.dot(h2, wf3_ref[...], preferred_element_type=jnp.float32)
                  + bf3_ref[...])                                    # (1, 10)

        # ---- softmax over classes (lane axis) ----
        m = jnp.max(logits, axis=-1, keepdims=True)
        e = jnp.exp(logits - m)
        o_ref[t] = e / jnp.sum(e, axis=-1, keepdims=True)


# ------------------------------ wrapper glue ------------------------------- #

def _banded_weights(conv_w, n_in_pos, n_out_pos, phase_block):
    """Turn a (O, C, 3, 3) conv into 3 banded matrices (one per kernel row).

    Row index    = w_in * C + c_in
    Column index = w_phase * phase_block + j_pooled * O + o   (zero padded)
    so a 1-D 3-tap "valid" convolution along W becomes a single matmul, and the
    subsequent stride-2 W-pool is an elementwise max of the two 128-lane-aligned
    phase blocks.
    """
    O, C, _, _ = conv_w.shape
    w = jnp.transpose(conv_w, (2, 3, 1, 0))                  # (kh, kw, C, O)
    win = jnp.arange(n_in_pos)[None, :, None]
    vout = jnp.arange(n_out_pos)[None, None, :]
    dj = jnp.arange(3)[:, None, None]
    sel = (win == vout + dj).astype(conv_w.dtype)            # (3, n_in, n_out)
    t = jnp.einsum('dwx,Ddco->Dwcxo', sel, w)                # (3, n_in, C, n_out, O)
    t = t.reshape(3, n_in_pos * C, n_out_pos // 2, 2, O)     # (.., j, b, O)
    t = jnp.transpose(t, (0, 1, 3, 2, 4))                    # (.., b, j, O)
    t = t.reshape(3, n_in_pos * C, 2, (n_out_pos // 2) * O)
    t = jnp.pad(t, ((0, 0), (0, 0), (0, 0),
                    (0, phase_block - (n_out_pos // 2) * O)))
    return t.reshape(3, n_in_pos * C, 2 * phase_block)


def _prepare_inputs(x_nchw, params):
    n = x_nchw.shape[0]
    # Input rows parity-deinterleaved so every conv1 tap needs only contiguous
    # row slices; lanes = w*3 + c.
    x = jnp.transpose(x_nchw, (0, 2, 3, 1))                  # NHWC (N,16,16,3)
    x = x.reshape(n, 16, 48).reshape(n, 8, 2, 48).transpose(0, 2, 1, 3)  # (N,2,8,48)

    m1 = _banded_weights(params["conv1_w"], 16, 14, 128)     # (3, 48, 256)
    m2 = _banded_weights(params["conv2_w"], 7, 4, 128)       # (3, 112, 256)
    m2 = jnp.pad(m2, ((0, 0), (0, 16), (0, 0)))              # (3, 128, 256)

    b1 = jnp.pad(jnp.tile(params["conv1_b"], 7), (0, 16)).reshape(1, 128)
    b2 = jnp.pad(jnp.tile(params["conv2_b"], 2), (0, 64)).reshape(1, 128)

    # fc1: permute torch's NCHW-flatten column order (o2, up, vp) into the
    # kernel's (up, vp, o2) lane order, split by pooled row (up) and zero-pad
    # to the kernel's 128-lane feature vectors.
    fc1 = params["fc1_w"]                                    # (128, 128)
    wf1 = fc1.reshape(128, 32, 2, 2).transpose(0, 2, 3, 1).reshape(128, 128).T
    wf1a = jnp.pad(wf1[0:64], ((0, 64), (0, 0)))             # up = 0 rows
    wf1b = jnp.pad(wf1[64:128], ((0, 64), (0, 0)))           # up = 1 rows
    bf1 = params["fc1_b"].reshape(1, 128)
    wf2 = params["fc2_w"].T
    bf2 = params["fc2_b"].reshape(1, 64)
    wf3 = params["fc3_w"].T
    bf3 = params["fc3_b"].reshape(1, 10)
    return x, m1, m2, b1, b2, wf1a, wf1b, bf1, wf2, bf2, wf3, bf3


@functools.partial(jax.jit, static_argnames="images_per_step")
def example_net_forward(x_nchw, params, images_per_step=1):
    n = x_nchw.shape[0]
    tb = images_per_step
    assert n % tb == 0, "batch must be divisible by images_per_step"
    n_classes = params["fc3_w"].shape[0]
    args = _prepare_inputs(x_nchw, params)

    def const_spec(shape):
        return pl.BlockSpec(shape, lambda i: (0,) * len(shape))

    out = pl.pallas_call(
        fused_net_kernel,
        out_shape=jax.ShapeDtypeStruct((n, 1, n_classes), jnp.float32),
        grid=(n // tb,),
        in_specs=[
            pl.BlockSpec((tb, 2, 8, 48), lambda i: (i, 0, 0, 0)),
            const_spec((3, 48, 256)),      # conv1 banded weights (VMEM-resident)
            const_spec((3, 128, 256)),     # conv2 banded weights
            const_spec((1, 128)),          # conv1 bias (lane-tiled, padded)
            const_spec((1, 128)),          # conv2 bias (lane-tiled, padded)
            const_spec((128, 128)),        # fc1 (top pooled row)
            const_spec((128, 128)),        # fc1 (bottom pooled row)
            const_spec((1, 128)),          # fc1 bias
            const_spec((128, 64)),         # fc2
            const_spec((1, 64)),           # fc2 bias
            const_spec((64, 10)),          # fc3
            const_spec((1, 10)),           # fc3 bias
        ],
        out_specs=pl.BlockSpec((tb, 1, n_classes), lambda i: (i, 0, 0)),
        compiler_params=pltpu.CompilerParams(
            dimension_semantics=("parallel",)),
    )(*args)
    return out.reshape(n, n_classes)


# --------------------------- pure-JAX reference ---------------------------- #

def reference_forward(x, params):
    def conv(x, w, b):
        y = lax.conv_general_dilated(
            x, w, (1, 1), "VALID",
            dimension_numbers=("NCHW", "OIHW", "NCHW"))
        return y + b.reshape(1, -1, 1, 1)

    def pool(x):
        return lax.reduce_window(x, -jnp.inf, lax.max,
                                 (1, 1, 2, 2), (1, 1, 2, 2), "VALID")

    y = pool(jax.nn.relu(conv(x, params["conv1_w"], params["conv1_b"])))
    y = pool(jax.nn.relu(conv(y, params["conv2_w"], params["conv2_b"])))
    y = y.reshape(y.shape[0], -1)                  # NCHW flatten, like torch
    y = jax.nn.relu(y @ params["fc1_w"].T + params["fc1_b"])
    y = jax.nn.relu(y @ params["fc2_w"].T + params["fc2_b"])
    y = y @ params["fc3_w"].T + params["fc3_b"]
    return jax.nn.softmax(y, axis=1)


# --------------------------------- main ------------------------------------ #

def init_params(key, image_channels=3, n_classes=10, fc1_in=128):
    ks = jax.random.split(key, 10)
    s = 0.1
    return {
        "conv1_w": s * jax.random.normal(ks[0], (16, image_channels, 3, 3), jnp.float32),
        "conv1_b": s * jax.random.normal(ks[1], (16,), jnp.float32),
        "conv2_w": s * jax.random.normal(ks[2], (32, 16, 3, 3), jnp.float32),
        "conv2_b": s * jax.random.normal(ks[3], (32,), jnp.float32),
        "fc1_w":   s * jax.random.normal(ks[4], (128, fc1_in), jnp.float32),
        "fc1_b":   s * jax.random.normal(ks[5], (128,), jnp.float32),
        "fc2_w":   s * jax.random.normal(ks[6], (64, 128), jnp.float32),
        "fc2_b":   s * jax.random.normal(ks[7], (64,), jnp.float32),
        "fc3_w":   s * jax.random.normal(ks[8], (n_classes, 64), jnp.float32),
        "fc3_b":   s * jax.random.normal(ks[9], (n_classes,), jnp.float32),
    }


if __name__ == "__main__":
    # image 16x16x3, batch 2 -> conv1: 14, pool: 7, conv2: 5, pool: 2
    # => fc1 input dim = 32 * 2 * 2 = 128
    key = jax.random.PRNGKey(0)
    kx, kp = jax.random.split(key)
    x = jax.random.normal(kx, (2, 3, 16, 16), jnp.float32)
    params = init_params(kp, image_channels=3, n_classes=10, fc1_in=128)

    out = jax.block_until_ready(example_net_forward(x, params, images_per_step=1))
    ref = jax.block_until_ready(reference_forward(x, params))

    assert out.shape == (2, 10), out.shape
    err = float(jnp.max(jnp.abs(out - ref)))
    assert jnp.allclose(out, ref, atol=1e-5, rtol=1e-5), err
    assert jnp.allclose(jnp.sum(out, axis=1), 1.0, atol=1e-5)

    print("KERNEL_OK")
</pallas_src>

<mosaic_0001>
module attributes {stable_mosaic.version = 11 : i64} {
  func.func @fused_net_kernel(%arg0: i32, %arg1: memref<1x2x8x48xf32, #tpu.memory_space<vmem>>, %arg2: memref<3x48x256xf32, #tpu.memory_space<vmem>>, %arg3: memref<3x128x256xf32, #tpu.memory_space<vmem>>, %arg4: memref<1x128xf32, #tpu.memory_space<vmem>>, %arg5: memref<1x128xf32, #tpu.memory_space<vmem>>, %arg6: memref<128x128xf32, #tpu.memory_space<vmem>>, %arg7: memref<128x128xf32, #tpu.memory_space<vmem>>, %arg8: memref<1x128xf32, #tpu.memory_space<vmem>>, %arg9: memref<128x64xf32, #tpu.memory_space<vmem>>, %arg10: memref<1x64xf32, #tpu.memory_space<vmem>>, %arg11: memref<64x10xf32, #tpu.memory_space<vmem>>, %arg12: memref<1x10xf32, #tpu.memory_space<vmem>>, %arg13: memref<1x1x10xf32, #tpu.memory_space<vmem>>) attributes {dimension_semantics = [#tpu.dimension_semantics<parallel>], iteration_bounds = array<i64: 2>, scalar_prefetch = 0 : i64, scratch_operands = 0 : i64, tpu.core_type = #tpu.core_type<tc>, window_params = [{transform_indices = @transform_0, window_bounds = array<i64: 1, 2, 8, 48>}, {pipeline_mode = #tpu.pipeline_mode<synchronous>, transform_indices = @transform_1, window_bounds = array<i64: 3, 48, 256>}, {pipeline_mode = #tpu.pipeline_mode<synchronous>, transform_indices = @transform_2, window_bounds = array<i64: 3, 128, 256>}, {pipeline_mode = #tpu.pipeline_mode<synchronous>, transform_indices = @transform_3, window_bounds = array<i64: 1, 128>}, {pipeline_mode = #tpu.pipeline_mode<synchronous>, transform_indices = @transform_4, window_bounds = array<i64: 1, 128>}, {pipeline_mode = #tpu.pipeline_mode<synchronous>, transform_indices = @transform_5, window_bounds = array<i64: 128, 128>}, {pipeline_mode = #tpu.pipeline_mode<synchronous>, transform_indices = @transform_6, window_bounds = array<i64: 128, 128>}, {pipeline_mode = #tpu.pipeline_mode<synchronous>, transform_indices = @transform_7, window_bounds = array<i64: 1, 128>}, {pipeline_mode = #tpu.pipeline_mode<synchronous>, transform_indices = @transform_8, window_bounds = array<i64: 128, 64>}, {pipeline_mode = #tpu.pipeline_mode<synchronous>, transform_indices = @transform_9, window_bounds = array<i64: 1, 64>}, {pipeline_mode = #tpu.pipeline_mode<synchronous>, transform_indices = @transform_10, window_bounds = array<i64: 64, 10>}, {pipeline_mode = #tpu.pipeline_mode<synchronous>, transform_indices = @transform_11, window_bounds = array<i64: 1, 10>}, {transform_indices = @transform_12, window_bounds = array<i64: 1, 1, 10>}]} {
    %c0 = arith.constant 0 : index
    %c0_0 = arith.constant 0 : index
    %c0_1 = arith.constant 0 : index
    %c0_2 = arith.constant 0 : index
    %0 = vector.load %arg1[%c0, %c0_0, %c0_1, %c0_2] : memref<1x2x8x48xf32, #tpu.memory_space<vmem>>, vector<1x2x8x48xf32>
    %1 = vector.shape_cast %0 : vector<1x2x8x48xf32> to vector<2x8x48xf32>
    %2 = vector.extract_strided_slice %1 {offsets = [0, 0, 0], sizes = [1, 7, 48], strides = [1, 1, 1]} : vector<2x8x48xf32> to vector<1x7x48xf32>
    %3 = vector.shape_cast %2 : vector<1x7x48xf32> to vector<7x48xf32>
    %c0_3 = arith.constant 0 : index
    %c0_4 = arith.constant 0 : index
    %c0_5 = arith.constant 0 : index
    %4 = vector.load %arg2[%c0_3, %c0_4, %c0_5] : memref<3x48x256xf32, #tpu.memory_space<vmem>>, vector<1x48x256xf32>
    %5 = vector.shape_cast %4 : vector<1x48x256xf32> to vector<48x256xf32>
    %cst = arith.constant dense<0.000000e+00> : vector<7x256xf32>
    %6 = tpu.matmul %3, %5, %cst {dimension_numbers = #tpu.dot_dimension_numbers<[1], [0], [0], [1], [0, 0, 1, 1], [], []>} : vector<7x48xf32>, vector<48x256xf32>, vector<7x256xf32> -> vector<7x256xf32>
    %7 = vector.extract_strided_slice %1 {offsets = [1, 0, 0], sizes = [1, 7, 48], strides = [1, 1, 1]} : vector<2x8x48xf32> to vector<1x7x48xf32>
    %8 = vector.shape_cast %7 : vector<1x7x48xf32> to vector<7x48xf32>
    %c1 = arith.constant 1 : index
    %c0_6 = arith.constant 0 : index
    %c0_7 = arith.constant 0 : index
    %9 = vector.load %arg2[%c1, %c0_6, %c0_7] : memref<3x48x256xf32, #tpu.memory_space<vmem>>, vector<1x48x256xf32>
    %10 = vector.shape_cast %9 : vector<1x48x256xf32> to vector<48x256xf32>
    %cst_8 = arith.constant dense<0.000000e+00> : vector<7x256xf32>
    %11 = tpu.matmul %8, %10, %cst_8 {dimension_numbers = #tpu.dot_dimension_numbers<[1], [0], [0], [1], [0, 0, 1, 1], [], []>} : vector<7x48xf32>, vector<48x256xf32>, vector<7x256xf32> -> vector<7x256xf32>
    %12 = arith.addf %6, %11 : vector<7x256xf32>
    %13 = vector.extract_strided_slice %1 {offsets = [0, 1, 0], sizes = [1, 7, 48], strides = [1, 1, 1]} : vector<2x8x48xf32> to vector<1x7x48xf32>
    %14 = vector.shape_cast %13 : vector<1x7x48xf32> to vector<7x48xf32>
    %c2 = arith.constant 2 : index
    %c0_9 = arith.constant 0 : index
    %c0_10 = arith.constant 0 : index
    %15 = vector.load %arg2[%c2, %c0_9, %c0_10] : memref<3x48x256xf32, #tpu.memory_space<vmem>>, vector<1x48x256xf32>
    %16 = vector.shape_cast %15 : vector<1x48x256xf32> to vector<48x256xf32>
    %cst_11 = arith.constant dense<0.000000e+00> : vector<7x256xf32>
    %17 = tpu.matmul %14, %16, %cst_11 {dimension_numbers = #tpu.dot_dimension_numbers<[1], [0], [0], [1], [0, 0, 1, 1], [], []>} : vector<7x48xf32>, vector<48x256xf32>, vector<7x256xf32> -> vector<7x256xf32>
    %18 = arith.addf %12, %17 : vector<7x256xf32>
    %19 = vector.extract_strided_slice %1 {offsets = [1, 0, 0], sizes = [1, 7, 48], strides = [1, 1, 1]} : vector<2x8x48xf32> to vector<1x7x48xf32>
    %20 = vector.shape_cast %19 : vector<1x7x48xf32> to vector<7x48xf32>
    %c0_12 = arith.constant 0 : index
    %c0_13 = arith.constant 0 : index
    %c0_14 = arith.constant 0 : index
    %21 = vector.load %arg2[%c0_12, %c0_13, %c0_14] : memref<3x48x256xf32, #tpu.memory_space<vmem>>, vector<1x48x256xf32>
    %22 = vector.shape_cast %21 : vector<1x48x256xf32> to vector<48x256xf32>
    %cst_15 = arith.constant dense<0.000000e+00> : vector<7x256xf32>
    %23 = tpu.matmul %20, %22, %cst_15 {dimension_numbers = #tpu.dot_dimension_numbers<[1], [0], [0], [1], [0, 0, 1, 1], [], []>} : vector<7x48xf32>, vector<48x256xf32>, vector<7x256xf32> -> vector<7x256xf32>
    %24 = vector.extract_strided_slice %1 {offsets = [0, 1, 0], sizes = [1, 7, 48], strides = [1, 1, 1]} : vector<2x8x48xf32> to vector<1x7x48xf32>
    %25 = vector.shape_cast %24 : vector<1x7x48xf32> to vector<7x48xf32>
    %c1_16 = arith.constant 1 : index
    %c0_17 = arith.constant 0 : index
    %c0_18 = arith.constant 0 : index
    %26 = vector.load %arg2[%c1_16, %c0_17, %c0_18] : memref<3x48x256xf32, #tpu.memory_space<vmem>>, vector<1x48x256xf32>
    %27 = vector.shape_cast %26 : vector<1x48x256xf32> to vector<48x256xf32>
    %cst_19 = arith.constant dense<0.000000e+00> : vector<7x256xf32>
    %28 = tpu.matmul %25, %27, %cst_19 {dimension_numbers = #tpu.dot_dimension_numbers<[1], [0], [0], [1], [0, 0, 1, 1], [], []>} : vector<7x48xf32>, vector<48x256xf32>, vector<7x256xf32> -> vector<7x256xf32>
    %29 = arith.addf %23, %28 : vector<7x256xf32>
    %30 = vector.extract_strided_slice %1 {offsets = [1, 1, 0], sizes = [1, 7, 48], strides = [1, 1, 1]} : vector<2x8x48xf32> to vector<1x7x48xf32>
    %31 = vector.shape_cast %30 : vector<1x7x48xf32> to vector<7x48xf32>
    %c2_20 = arith.constant 2 : index
    %c0_21 = arith.constant 0 : index
    %c0_22 = arith.constant 0 : index
    %32 = vector.load %arg2[%c2_20, %c0_21, %c0_22] : memref<3x48x256xf32, #tpu.memory_space<vmem>>, vector<1x48x256xf32>
    %33 = vector.shape_cast %32 : vector<1x48x256xf32> to vector<48x256xf32>
    %cst_23 = arith.constant dense<0.000000e+00> : vector<7x256xf32>
    %34 = tpu.matmul %31, %33, %cst_23 {dimension_numbers = #tpu.dot_dimension_numbers<[1], [0], [0], [1], [0, 0, 1, 1], [], []>} : vector<7x48xf32>, vector<48x256xf32>, vector<7x256xf32> -> vector<7x256xf32>
    %35 = arith.addf %29, %34 : vector<7x256xf32>
    %36 = arith.maximumf %18, %35 : vector<7x256xf32>
    %37 = vector.extract_strided_slice %36 {offsets = [0, 0], sizes = [7, 128], strides = [1, 1]} : vector<7x256xf32> to vector<7x128xf32>
    %38 = vector.extract_strided_slice %36 {offsets = [0, 128], sizes = [7, 128], strides = [1, 1]} : vector<7x256xf32> to vector<7x128xf32>
    %39 = arith.maximumf %37, %38 : vector<7x128xf32>
    %c0_24 = arith.constant 0 : index
    %c0_25 = arith.constant 0 : index
    %40 = vector.load %arg4[%c0_24, %c0_25] : memref<1x128xf32, #tpu.memory_space<vmem>>, vector<1x128xf32>
    %41 = vector.broadcast %40 : vector<1x128xf32> to vector<7x128xf32>
    %42 = arith.addf %39, %41 : vector<7x128xf32>
    %cst_26 = arith.constant 0.000000e+00 : f32
    %43 = vector.broadcast %cst_26 : f32 to vector<7x128xf32>
    %44 = arith.maximumf %42, %43 : vector<7x128xf32>
    %45 = vector.extract_strided_slice %44 {offsets = [0, 0], sizes = [4, 128], strides = [1, 1]} : vector<7x128xf32> to vector<4x128xf32>
    %c0_27 = arith.constant 0 : index
    %c0_28 = arith.constant 0 : index
    %c0_29 = arith.constant 0 : index
    %46 = vector.load %arg3[%c0_27, %c0_28, %c0_29] : memref<3x128x256xf32, #tpu.memory_space<vmem>>, vector<1x128x256xf32>
    %47 = vector.shape_cast %46 : vector<1x128x256xf32> to vector<128x256xf32>
    %cst_30 = arith.constant dense<0.000000e+00> : vector<4x256xf32>
    %48 = tpu.matmul %45, %47, %cst_30 {dimension_numbers = #tpu.dot_dimension_numbers<[1], [0], [0], [1], [0, 0, 1, 1], [], []>} : vector<4x128xf32>, vector<128x256xf32>, vector<4x256xf32> -> vector<4x256xf32>
    %49 = vector.extract_strided_slice %44 {offsets = [1, 0], sizes = [4, 128], strides = [1, 1]} : vector<7x128xf32> to vector<4x128xf32>
    %c1_31 = arith.constant 1 : index
    %c0_32 = arith.constant 0 : index
    %c0_33 = arith.constant 0 : index
    %50 = vector.load %arg3[%c1_31, %c0_32, %c0_33] : memref<3x128x256xf32, #tpu.memory_space<vmem>>, vector<1x128x256xf32>
    %51 = vector.shape_cast %50 : vector<1x128x256xf32> to vector<128x256xf32>
    %cst_34 = arith.constant dense<0.000000e+00> : vector<4x256xf32>
    %52 = tpu.matmul %49, %51, %cst_34 {dimension_numbers = #tpu.dot_dimension_numbers<[1], [0], [0], [1], [0, 0, 1, 1], [], []>} : vector<4x128xf32>, vector<128x256xf32>, vector<4x256xf32> -> vector<4x256xf32>
    %53 = arith.addf %48, %52 : vector<4x256xf32>
    %54 = vector.extract_strided_slice %44 {offsets = [2, 0], sizes = [4, 128], strides = [1, 1]} : vector<7x128xf32> to vector<4x128xf32>
    %c2_35 = arith.constant 2 : index
    %c0_36 = arith.constant 0 : index
    %c0_37 = arith.constant 0 : index
    %55 = vector.load %arg3[%c2_35, %c0_36, %c0_37] : memref<3x128x256xf32, #tpu.memory_space<vmem>>, vector<1x128x256xf32>
    %56 = vector.shape_cast %55 : vector<1x128x256xf32> to vector<128x256xf32>
    %cst_38 = arith.constant dense<0.000000e+00> : vector<4x256xf32>
    %57 = tpu.matmul %54, %56, %cst_38 {dimension_numbers = #tpu.dot_dimension_numbers<[1], [0], [0], [1], [0, 0, 1, 1], [], []>} : vector<4x128xf32>, vector<128x256xf32>, vector<4x256xf32> -> vector<4x256xf32>
    %58 = arith.addf %53, %57 : vector<4x256xf32>
    %59 = vector.extract_strided_slice %58 {offsets = [0, 0], sizes = [1, 256], strides = [1, 1]} : vector<4x256xf32> to vector<1x256xf32>
    %60 = vector.extract_strided_slice %58 {offsets = [1, 0], sizes = [1, 256], strides = [1, 1]} : vector<4x256xf32> to vector<1x256xf32>
    %61 = arith.maximumf %59, %60 : vector<1x256xf32>
    %62 = vector.extract_strided_slice %58 {offsets = [2, 0], sizes = [1, 256], strides = [1, 1]} : vector<4x256xf32> to vector<1x256xf32>
    %63 = vector.extract_strided_slice %58 {offsets = [3, 0], sizes = [1, 256], strides = [1, 1]} : vector<4x256xf32> to vector<1x256xf32>
    %64 = arith.maximumf %62, %63 : vector<1x256xf32>
    %65 = vector.extract_strided_slice %61 {offsets = [0, 0], sizes = [1, 128], strides = [1, 1]} : vector<1x256xf32> to vector<1x128xf32>
    %66 = vector.extract_strided_slice %61 {offsets = [0, 128], sizes = [1, 128], strides = [1, 1]} : vector<1x256xf32> to vector<1x128xf32>
    %67 = arith.maximumf %65, %66 : vector<1x128xf32>
    %68 = vector.extract_strided_slice %64 {offsets = [0, 0], sizes = [1, 128], strides = [1, 1]} : vector<1x256xf32> to vector<1x128xf32>
    %69 = vector.extract_strided_slice %64 {offsets = [0, 128], sizes = [1, 128], strides = [1, 1]} : vector<1x256xf32> to vector<1x128xf32>
    %70 = arith.maximumf %68, %69 : vector<1x128xf32>
    %c0_39 = arith.constant 0 : index
    %c0_40 = arith.constant 0 : index
    %71 = vector.load %arg5[%c0_39, %c0_40] : memref<1x128xf32, #tpu.memory_space<vmem>>, vector<1x128xf32>
    %72 = arith.addf %67, %71 : vector<1x128xf32>
    %cst_41 = arith.constant 0.000000e+00 : f32
    %73 = vector.broadcast %cst_41 : f32 to vector<1x128xf32>
    %74 = arith.maximumf %72, %73 : vector<1x128xf32>
    %c0_42 = arith.constant 0 : index
    %c0_43 = arith.constant 0 : index
    %75 = vector.load %arg5[%c0_42, %c0_43] : memref<1x128xf32, #tpu.memory_space<vmem>>, vector<1x128xf32>
    %76 = arith.addf %70, %75 : vector<1x128xf32>
    %cst_44 = arith.constant 0.000000e+00 : f32
    %77 = vector.broadcast %cst_44 : f32 to vector<1x128xf32>
    %78 = arith.maximumf %76, %77 : vector<1x128xf32>
    %c0_45 = arith.constant 0 : index
    %c0_46 = arith.constant 0 : index
    %79 = vector.load %arg6[%c0_45, %c0_46] : memref<128x128xf32, #tpu.memory_space<vmem>>, vector<128x128xf32>
    %cst_47 = arith.constant dense<0.000000e+00> : vector<1x128xf32>
    %80 = tpu.matmul %74, %79, %cst_47 {dimension_numbers = #tpu.dot_dimension_numbers<[1], [0], [0], [1], [0, 0, 1, 1], [], []>} : vector<1x128xf32>, vector<128x128xf32>, vector<1x128xf32> -> vector<1x128xf32>
    %c0_48 = arith.constant 0 : index
    %c0_49 = arith.constant 0 : index
    %81 = vector.load %arg7[%c0_48, %c0_49] : memref<128x128xf32, #tpu.memory_space<vmem>>, vector<128x128xf32>
    %cst_50 = arith.constant dense<0.000000e+00> : vector<1x128xf32>
    %82 = tpu.matmul %78, %81, %cst_50 {dimension_numbers = #tpu.dot_dimension_numbers<[1], [0], [0], [1], [0, 0, 1, 1], [], []>} : vector<1x128xf32>, vector<128x128xf32>, vector<1x128xf32> -> vector<1x128xf32>
    %83 = arith.addf %80, %82 : vector<1x128xf32>
    %c0_51 = arith.constant 0 : index
    %c0_52 = arith.constant 0 : index
    %84 = vector.load %arg8[%c0_51, %c0_52] : memref<1x128xf32, #tpu.memory_space<vmem>>, vector<1x128xf32>
    %85 = arith.addf %83, %84 : vector<1x128xf32>
    %cst_53 = arith.constant 0.000000e+00 : f32
    %86 = vector.broadcast %cst_53 : f32 to vector<1x128xf32>
    %87 = arith.maximumf %85, %86 : vector<1x128xf32>
    %c0_54 = arith.constant 0 : index
    %c0_55 = arith.constant 0 : index
    %88 = vector.load %arg9[%c0_54, %c0_55] : memref<128x64xf32, #tpu.memory_space<vmem>>, vector<128x64xf32>
    %cst_56 = arith.constant dense<0.000000e+00> : vector<1x64xf32>
    %89 = tpu.matmul %87, %88, %cst_56 {dimension_numbers = #tpu.dot_dimension_numbers<[1], [0], [0], [1], [0, 0, 1, 1], [], []>} : vector<1x128xf32>, vector<128x64xf32>, vector<1x64xf32> -> vector<1x64xf32>
    %c0_57 = arith.constant 0 : index
    %c0_58 = arith.constant 0 : index
    %90 = vector.load %arg10[%c0_57, %c0_58] : memref<1x64xf32, #tpu.memory_space<vmem>>, vector<1x64xf32>
    %91 = arith.addf %89, %90 : vector<1x64xf32>
    %cst_59 = arith.constant 0.000000e+00 : f32
    %92 = vector.broadcast %cst_59 : f32 to vector<1x64xf32>
    %93 = arith.maximumf %91, %92 : vector<1x64xf32>
    %c0_60 = arith.constant 0 : index
    %c0_61 = arith.constant 0 : index
    %94 = vector.load %arg11[%c0_60, %c0_61] : memref<64x10xf32, #tpu.memory_space<vmem>>, vector<64x10xf32>
    %cst_62 = arith.constant dense<0.000000e+00> : vector<1x10xf32>
    %95 = tpu.matmul %93, %94, %cst_62 {dimension_numbers = #tpu.dot_dimension_numbers<[1], [0], [0], [1], [0, 0, 1, 1], [], []>} : vector<1x64xf32>, vector<64x10xf32>, vector<1x10xf32> -> vector<1x10xf32>
    %c0_63 = arith.constant 0 : index
    %c0_64 = arith.constant 0 : index
    %96 = vector.load %arg12[%c0_63, %c0_64] : memref<1x10xf32, #tpu.memory_space<vmem>>, vector<1x10xf32>
    %97 = arith.addf %95, %96 : vector<1x10xf32>
    %cst_65 = arith.constant dense<0xFF800000> : vector<1xf32>
    %98 = vector.multi_reduction <maximumf>, %97, %cst_65 [1] : vector<1x10xf32> to vector<1xf32>
    %99 = vector.shape_cast %98 : vector<1xf32> to vector<1x1xf32>
    %100 = vector.broadcast %99 : vector<1x1xf32> to vector<1x10xf32>
    %101 = arith.subf %97, %100 : vector<1x10xf32>
    %102 = math.exp %101 : vector<1x10xf32>
    %cst_66 = arith.constant dense<0.000000e+00> : vector<1xf32>
    %103 = vector.multi_reduction <add>, %102, %cst_66 [1] : vector<1x10xf32> to vector<1xf32>
    %104 = vector.shape_cast %103 : vector<1xf32> to vector<1x1xf32>
    %105 = vector.broadcast %104 : vector<1x1xf32> to vector<1x10xf32>
    %106 = arith.divf %102, %105 : vector<1x10xf32>
    %c0_67 = arith.constant 0 : index
    %c0_68 = arith.constant 0 : index
    %c0_69 = arith.constant 0 : index
    %107 = vector.load %arg13[%c0_67, %c0_68, %c0_69] : memref<1x1x10xf32, #tpu.memory_space<vmem>>, vector<1x1x10xf32>
    %108 = vector.shape_cast %107 : vector<1x1x10xf32> to vector<1x10xf32>
    %109 = vector.shape_cast %106 : vector<1x10xf32> to vector<1x1x10xf32>
    tpu.vector_store %arg13[%c0_67, %c0_68, %c0_69], %109 {strides = array<i32>} : memref<1x1x10xf32, #tpu.memory_space<vmem>>, vector<1x1x10xf32>,
    return
  }
  func.func @transform_0(%arg0: i32) -> (i32, i32, i32, i32) {
    %c0_i32 = arith.constant 0 : i32
    %c0_i32_0 = arith.constant 0 : i32
    %c0_i32_1 = arith.constant 0 : i32
    %c0_i32_2 = arith.constant 0 : i32
    return %arg0, %c0_i32, %c0_i32_0, %c0_i32_1 : i32, i32, i32, i32
  }
  func.func @transform_1(%arg0: i32) -> (i32, i32, i32) {
    %c0_i32 = arith.constant 0 : i32
    %c0_i32_0 = arith.constant 0 : i32
    %c0_i32_1 = arith.constant 0 : i32
    %c0_i32_2 = arith.constant 0 : i32
    return %c0_i32, %c0_i32_0, %c0_i32_1 : i32, i32, i32
  }
  func.func @transform_2(%arg0: i32) -> (i32, i32, i32) {
    %c0_i32 = arith.constant 0 : i32
    %c0_i32_0 = arith.constant 0 : i32
    %c0_i32_1 = arith.constant 0 : i32
    %c0_i32_2 = arith.constant 0 : i32
    return %c0_i32, %c0_i32_0, %c0_i32_1 : i32, i32, i32
  }
  func.func @transform_3(%arg0: i32) -> (i32, i32) {
    %c0_i32 = arith.constant 0 : i32
    %c0_i32_0 = arith.constant 0 : i32
    %c0_i32_1 = arith.constant 0 : i32
    return %c0_i32, %c0_i32_0 : i32, i32
  }
  func.func @transform_4(%arg0: i32) -> (i32, i32) {
    %c0_i32 = arith.constant 0 : i32
    %c0_i32_0 = arith.constant 0 : i32
    %c0_i32_1 = arith.constant 0 : i32
    return %c0_i32, %c0_i32_0 : i32, i32
  }
  func.func @transform_5(%arg0: i32) -> (i32, i32) {
    %c0_i32 = arith.constant 0 : i32
    %c0_i32_0 = arith.constant 0 : i32
    %c0_i32_1 = arith.constant 0 : i32
    return %c0_i32, %c0_i32_0 : i32, i32
  }
  func.func @transform_6(%arg0: i32) -> (i32, i32) {
    %c0_i32 = arith.constant 0 : i32
    %c0_i32_0 = arith.constant 0 : i32
    %c0_i32_1 = arith.constant 0 : i32
    return %c0_i32, %c0_i32_0 : i32, i32
  }
  func.func @transform_7(%arg0: i32) -> (i32, i32) {
    %c0_i32 = arith.constant 0 : i32
    %c0_i32_0 = arith.constant 0 : i32
    %c0_i32_1 = arith.constant 0 : i32
    return %c0_i32, %c0_i32_0 : i32, i32
  }
  func.func @transform_8(%arg0: i32) -> (i32, i32) {
    %c0_i32 = arith.constant 0 : i32
    %c0_i32_0 = arith.constant 0 : i32
    %c0_i32_1 = arith.constant 0 : i32
    return %c0_i32, %c0_i32_0 : i32, i32
  }
  func.func @transform_9(%arg0: i32) -> (i32, i32) {
    %c0_i32 = arith.constant 0 : i32
    %c0_i32_0 = arith.constant 0 : i32
    %c0_i32_1 = arith.constant 0 : i32
    return %c0_i32, %c0_i32_0 : i32, i32
  }
  func.func @transform_10(%arg0: i32) -> (i32, i32) {
    %c0_i32 = arith.constant 0 : i32
    %c0_i32_0 = arith.constant 0 : i32
    %c0_i32_1 = arith.constant 0 : i32
    return %c0_i32, %c0_i32_0 : i32, i32
  }
  func.func @transform_11(%arg0: i32) -> (i32, i32) {
    %c0_i32 = arith.constant 0 : i32
    %c0_i32_0 = arith.constant 0 : i32
    %c0_i32_1 = arith.constant 0 : i32
    return %c0_i32, %c0_i32_0 : i32, i32
  }
  func.func @transform_12(%arg0: i32) -> (i32, i32, i32) {
    %c0_i32 = arith.constant 0 : i32
    %c0_i32_0 = arith.constant 0 : i32
    %c0_i32_1 = arith.constant 0 : i32
    return %arg0, %c0_i32, %c0_i32_0 : i32, i32, i32
  }
}

</mosaic_0001>

<llo_original>
// kernel: tile.18
$region0: #{tile.18}
  #allocation0 [shape = 's32[1]{0}', space=sflag, size = 0x4, scoped, tag = 'scoped memory for tile.18']
  %s0 = inlined_call_operand.vmem [shape: f32[32], index: 0, kind: input, shape index: {}]
  %s1 = inlined_call_operand.vmem [shape: f32[2,32], index: 1, kind: output, shape index: {}]
  // Predicated region
  $region2: #{tile.18} parent=0 // pred_check
    _
  $region3: #{tile.18} parent=0 // pred_check_branch
    %3 = sbr.rel (0) target = $region5
  $region4: #{tile.18} parent=0 // pred_region
    _
  $region5: #{tile.18} parent=0 // pred_fallthru
    _
  %v4 = vld [vmem:[%s0] ss:$0 sm:$0xff]
  %5 = vst [vmem:[%s1] sm:$0x3] %v4

// kernel: tile.19
$region0: #{tile.19}
  %s0 = inlined_call_operand.vmem [shape: f32[2,32], index: 0, kind: input, shape index: {}]
  %s1 = inlined_call_operand.vmem [shape: f32[64], index: 1, kind: output, shape index: {}]
  $region1: #{tile.19} parent=0
    #allocation0 [shape = 'u8[4096]{0}', space=vmem, size = 0x1000, scoped, tag = 'scoped mem for output reshape']
    #allocation1 [shape = 'u8[4096]{0}', space=vmem, size = 0x1000, scoped, tag = 'scoped mem for input reshape']
    %s3 = sshll.u32 1, 2
    %s4 = ssub.s32 %s3, 1
    %v5 = vld [vmem:[%s0] sm:%s4]
    %6 = vst [vmem:[#allocation1] sm:%s4] %v5
    %v7 = vld [vmem:[#allocation1] sm:$0x1]
    %vm8 = vcmask 261120
    %9 = vst.msk [vmem:[#allocation0] sm:$0x1] %vm8, %v7
    %s10 = scalar_lea.vmem [#allocation1], 1
    %v11 = vld [vmem:[%s10] sm:$0x1]
    %12 = vrot.lane.b32.xlu0 %v11, 32
    %v13 = vpop.permute.xlu0 %12
    %vm14 = vcmask 523520
    %15 = vst.msk [vmem:[#allocation0] sm:$0x1] %vm14, %v13
    %s17 = sshll.u32 1, 1
    %s18 = ssub.s32 %s17, 1
    %v20 = vld [vmem:[#allocation0] sm:%s18]
    %s21 = sshll.u32 1, 1
    %s22 = ssub.s32 %s21, 1
    %23 = vst [vmem:[%s1] sm:%s22] %v20

// kernel: tile.13
$region0: #{tile.13}
  #allocation0 [shape = 's32[1]{0}', space=sflag, size = 0x4, scoped, tag = 'scoped memory for tile.13']
  %s0 = inlined_call_operand.vmem [shape: f32[16], index: 0, kind: input, shape index: {}]
  %s1 = inlined_call_operand.vmem [shape: f32[7,16], index: 1, kind: output, shape index: {}]
  // Predicated region
  $region2: #{tile.13} parent=0 // pred_check
    _
  $region3: #{tile.13} parent=0 // pred_check_branch
    %3 = sbr.rel (0) target = $region5
  $region4: #{tile.13} parent=0 // pred_region
    _
  $region5: #{tile.13} parent=0 // pred_fallthru
    _
  %v4 = vld [vmem:[%s0] ss:$0 sm:$0xff]
  %5 = vst [vmem:[%s1] sm:$0xff] %v4

// kernel: tile.14
$region0: #{tile.14}
  %s0 = inlined_call_operand.vmem [shape: f32[7,16], index: 0, kind: input, shape index: {}]
  %s1 = inlined_call_operand.vmem [shape: f32[112], index: 1, kind: output, shape index: {}]
  $region1: #{tile.14} parent=0
    #allocation0 [shape = 'u8[4096]{0}', space=vmem, size = 0x1000, scoped, tag = 'scoped mem for output reshape']
    %v2 = vld [vmem:[%s0] sm:$0x1]
    %vm3 = vcmask 130048
    %4 = vst.msk [vmem:[#allocation0] sm:$0x1] %vm3, %v2
    %s5 = scalar_lea.vmem %s0, 6
    %v6 = vld [vmem:[%s5] sm:$0x1]
    %7 = vrot.lane.b32.xlu0 %v6, 96
    %v8 = vpop.permute.xlu0 %7
    %vm9 = vcmask 917248
    %10 = vst.msk [vmem:[#allocation0] sm:$0x1] %vm9, %v8
    %s11 = scalar_lea.vmem %s0, 5
    %v12 = vld [vmem:[%s11] sm:$0x1]
    %13 = vrot.lane.b32.xlu0 %v12, 80
    %v14 = vpop.permute.xlu0 %13
    %vm15 = vcmask 786048
    %16 = vst.msk [vmem:[#allocation0] sm:$0x1] %vm15, %v14
    %s17 = scalar_lea.vmem %s0, 4
    %v18 = vld [vmem:[%s17] sm:$0x1]
    %19 = vrot.lane.b32.xlu0 %v18, 64
    %v20 = vpop.permute.xlu0 %19
    %vm21 = vcmask 654848
    %22 = vst.msk [vmem:[#allocation0] sm:$0x1] %vm21, %v20
    %s23 = scalar_lea.vmem %s0, 3
    %v24 = vld [vmem:[%s23] sm:$0x1]
    %25 = vrot.lane.b32.xlu0 %v24, 48
    %v26 = vpop.permute.xlu0 %25
    %vm27 = vcmask 523648
    %28 = vst.msk [vmem:[#allocation0] sm:$0x1] %vm27, %v26
    %s29 = scalar_lea.vmem %s0, 2
    %v30 = vld [vmem:[%s29] sm:$0x1]
    %31 = vrot.lane.b32.xlu0 %v30, 32
    %v32 = vpop.permute.xlu0 %31
    %vm33 = vcmask 392448
    %34 = vst.msk [vmem:[#allocation0] sm:$0x1] %vm33, %v32
    %s35 = scalar_lea.vmem %s0, 1
    %v36 = vld [vmem:[%s35] sm:$0x1]
    %37 = vrot.lane.b32.xlu0 %v36, 16
    %v38 = vpop.permute.xlu0 %37
    %vm39 = vcmask 261248
    %40 = vst.msk [vmem:[#allocation0] sm:$0x1] %vm39, %v38
    %s42 = sshll.u32 1, 1
    %s43 = ssub.s32 %s42, 1
    %v45 = vld [vmem:[#allocation0] sm:%s43]
    %s46 = sshll.u32 1, 1
    %s47 = ssub.s32 %s46, 1
    %48 = vst [vmem:[%s1] sm:%s47] %v45

// kernel: example_net_forward.1
$region0: #{example_net_forward.1}
  #allocation0 [shape = 'u32[]', space=smem, size = 0x4, offset = 0x4, fixed_abs, tag = 'smem constant byte address 0x4 - core index']
  #allocation1 [shape = 'u32[144,128]{1,0:T(1,128)}', space=vmem, size = 0x12000, scoped, tag = 'internal scratch']
  %s0 = inlined_call_operand.vmem [shape: f32[2,2,8,48], index: 0, kind: input, shape index: {}]
  %s1 = inlined_call_operand.vmem [shape: f32[3,48,256], index: 1, kind: input, shape index: {}]
  %s2 = inlined_call_operand.vmem [shape: f32[3,128,256], index: 2, kind: input, shape index: {}]
  %s3 = inlined_call_operand.vmem [shape: f32[1,128], index: 3, kind: input, shape index: {}]
  %s4 = inlined_call_operand.vmem [shape: f32[1,128], index: 4, kind: input, shape index: {}]
  %s5 = inlined_call_operand.vmem [shape: f32[128,128], index: 5, kind: input, shape index: {}]
  %s6 = inlined_call_operand.vmem [shape: f32[128,128], index: 6, kind: input, shape index: {}]
  %s7 = inlined_call_operand.vmem [shape: f32[1,128], index: 7, kind: input, shape index: {}]
  %s8 = inlined_call_operand.vmem [shape: f32[128,64], index: 8, kind: input, shape index: {}]
  %s9 = inlined_call_operand.vmem [shape: f32[1,64], index: 9, kind: input, shape index: {}]
  %s10 = inlined_call_operand.vmem [shape: f32[64,10], index: 10, kind: input, shape index: {}]
  %s11 = inlined_call_operand.vmem [shape: f32[1,10], index: 11, kind: input, shape index: {}]
  %s12 = inlined_call_operand.hbm [shape: f32[2,1,10], index: 12, kind: output, shape index: {}]
  %s13 = sld [smem:[#allocation0]]
  $region81: #{example_net_forward.1} parent=0
    _
  %s15 = ssub.s32 1, %s13
  %s16 = scalar_select 0, %s15, %s13
  $region1: #{example_net_forward.1} parent=0
    #allocation2 [shape = 'u8[1024]{0}', space=vmem, size = 0x400, scoped, tag = 'output window, operand 0']
    #allocation3 [shape = 's32[2]{0}', space=sflag, size = 0x8, scoped, tag = 'scoped memory for example_net_forward.1']
    %17 = vsyncpa [#allocation3], 0
    %s18 = scalar_lea.sflag [#allocation3], 1
    %19 = vsyncpa %s18, 0
    loop: start=0, step=1, limit=4
    $region2: #{example_net_forward.1} parent=1 // loop_pre_header
      _
    $region3: #{example_net_forward.1} parent=1 // loop_header
      %s21 = sphi 0, %s25
      %p22 = scmp.ge.s32.totalorder %s21, 4
      %s31 = sphi 0, %s33
      %s34 = sphi 0, %s31
      %s35 = sphi 0, %s34
      %s51 = sphi 0, %s35
      %s55 = sphi 0, %s55
      %s57 = sphi 0, %s55
      %s58 = sphi 0, %s57
      %s72 = sphi 0, %s58
      %s76 = sphi 0, %s76
      %s78 = sphi 0, %s76
      %s79 = sphi 0, %s78
      %s93 = sphi 0, %s79
      %s97 = sphi 0, %s97
      %s99 = sphi 0, %s97
      %s100 = sphi 0, %s99
      %s114 = sphi 0, %s100
      %s118 = sphi 0, %s118
      %s120 = sphi 0, %s118
      %s121 = sphi 0, %s120
      %s135 = sphi 0, %s121
      %s139 = sphi 0, %s139
      %s141 = sphi 0, %s139
      %s142 = sphi 0, %s141
      %s156 = sphi 0, %s142
      %s160 = sphi 0, %s160
      %s162 = sphi 0, %s160
      %s163 = sphi 0, %s162
      %s177 = sphi 0, %s163
      %s181 = sphi 0, %s181
      %s183 = sphi 0, %s181
      %s184 = sphi 0, %s183
      %s198 = sphi 0, %s184
      %s202 = sphi 0, %s202
      %s204 = sphi 0, %s202
      %s205 = sphi 0, %s204
      %s219 = sphi 0, %s205
      %s223 = sphi 0, %s223
      %s225 = sphi 0, %s223
      %s226 = sphi 0, %s225
      %s240 = sphi 0, %s226
      %s244 = sphi 0, %s244
      %s246 = sphi 0, %s244
      %s247 = sphi 0, %s246
      %s261 = sphi 0, %s247
      %s265 = sphi 0, %s265
      %s267 = sphi 0, %s265
      %s268 = sphi 0, %s267
      %s282 = sphi 0, %s268
      %s288 = sphi 0, %s290
      %s291 = sphi 0, %s288
      %s292 = sphi 0, %s291
      %s308 = sphi 0, %s292
    $region4: #{example_net_forward.1} parent=1 // loop_header_branch
      %24 = sbr.rel (%p22) target = $region8
    $region5: #{example_net_forward.1} parent=1 // loop_body
      %s26 = ssub.s32 %s21, 1
      %s27 = ssub.s32 %s21, 2
      %s28 = sadd.s32 %s21, 1
      %s29 = ssub.s32 %s21, %s28
      %p30 = scmp.eq.s32.totalorder %s29, 0
      %s32 = sadd.s32 %s31, 1
      %s33 = scalar_select %p30, %s31, %s32
      %p36 = pneg %p30
      %p37 = scmp.eq.s32.totalorder %s21, 1
      %p38 = por %p36, %p37
      %p39 = scmp.ne.s32.totalorder %s31, %s34
      %p40 = scmp.eq.s32.totalorder %s21, 0
      %p41 = por %p39, %p40
      %p42 = scmp.ne.s32.totalorder %s31, %s34
      %p43 = scmp.eq.s32.totalorder %s26, 1
      %p44 = por %p42, %p43
      %p45 = scmp.ne.s32.totalorder %s34, %s35
      %p46 = scmp.eq.s32.totalorder %s26, 0
      %p47 = por %p45, %p46
      %p48 = scmp.ne.s32.totalorder %s34, %s35
      %p49 = scmp.eq.s32.totalorder %s27, 1
      %p50 = por %p48, %p49
      %p52 = scmp.ne.s32.totalorder %s35, %s51
      %p53 = scmp.eq.s32.totalorder %s27, 0
      %p54 = por %p52, %p53
      %s56 = sadd.s32 %s55, 1
      %p59 = scmp.eq.s32.totalorder %s21, 1
      %p60 = scmp.ne.s32.totalorder %s55, %s57
      %p61 = scmp.eq.s32.totalorder %s21, 0
      %p62 = por %p60, %p61
      %p63 = scmp.ne.s32.totalorder %s55, %s57
      %p64 = scmp.eq.s32.totalorder %s26, 1
      %p65 = por %p63, %p64
      %p66 = scmp.ne.s32.totalorder %s57, %s58
      %p67 = scmp.eq.s32.totalorder %s26, 0
      %p68 = por %p66, %p67
      %p69 = scmp.ne.s32.totalorder %s57, %s58
      %p70 = scmp.eq.s32.totalorder %s27, 1
      %p71 = por %p69, %p70
      %p73 = scmp.ne.s32.totalorder %s58, %s72
      %p74 = scmp.eq.s32.totalorder %s27, 0
      %p75 = por %p73, %p74
      %s77 = sadd.s32 %s76, 1
      %p80 = scmp.eq.s32.totalorder %s21, 1
      %p81 = scmp.ne.s32.totalorder %s76, %s78
      %p82 = scmp.eq.s32.totalorder %s21, 0
      %p83 = por %p81, %p82
      %p84 = scmp.ne.s32.totalorder %s76, %s78
      %p85 = scmp.eq.s32.totalorder %s26, 1
      %p86 = por %p84, %p85
      %p87 = scmp.ne.s32.totalorder %s78, %s79
      %p88 = scmp.eq.s32.totalorder %s26, 0
      %p89 = por %p87, %p88
      %p90 = scmp.ne.s32.totalorder %s78, %s79
      %p91 = scmp.eq.s32.totalorder %s27, 1
      %p92 = por %p90, %p91
      %p94 = scmp.ne.s32.totalorder %s79, %s93
      %p95 = scmp.eq.s32.totalorder %s27, 0
      %p96 = por %p94, %p95
      %s98 = sadd.s32 %s97, 1
      %p101 = scmp.eq.s32.totalorder %s21, 1
      %p102 = scmp.ne.s32.totalorder %s97, %s99
      %p103 = scmp.eq.s32.totalorder %s21, 0
      %p104 = por %p102, %p103
      %p105 = scmp.ne.s32.totalorder %s97, %s99
      %p106 = scmp.eq.s32.totalorder %s26, 1
      %p107 = por %p105, %p106
      %p108 = scmp.ne.s32.totalorder %s99, %s100
      %p109 = scmp.eq.s32.totalorder %s26, 0
      %p110 = por %p108, %p109
      %p111 = scmp.ne.s32.totalorder %s99, %s100
      %p112 = scmp.eq.s32.totalorder %s27, 1
      %p113 = por %p111, %p112
      %p115 = scmp.ne.s32.totalorder %s100, %s114
      %p116 = scmp.eq.s32.totalorder %s27, 0
      %p117 = por %p115, %p116
      %s119 = sadd.s32 %s118, 1
      %p122 = scmp.eq.s32.totalorder %s21, 1
      %p123 = scmp.ne.s32.totalorder %s118, %s120
      %p124 = scmp.eq.s32.totalorder %s21, 0
      %p125 = por %p123, %p124
      %p126 = scmp.ne.s32.totalorder %s118, %s120
      %p127 = scmp.eq.s32.totalorder %s26, 1
      %p128 = por %p126, %p127
      %p129 = scmp.ne.s32.totalorder %s120, %s121
      %p130 = scmp.eq.s32.totalorder %s26, 0
      %p131 = por %p129, %p130
      %p132 = scmp.ne.s32.totalorder %s120, %s121
      %p133 = scmp.eq.s32.totalorder %s27, 1
      %p134 = por %p132, %p133
      %p136 = scmp.ne.s32.totalorder %s121, %s135
      %p137 = scmp.eq.s32.totalorder %s27, 0
      %p138 = por %p136, %p137
      %s140 = sadd.s32 %s139, 1
      %p143 = scmp.eq.s32.totalorder %s21, 1
      %p144 = scmp.ne.s32.totalorder %s139, %s141
      %p145 = scmp.eq.s32.totalorder %s21, 0
      %p146 = por %p144, %p145
      %p147 = scmp.ne.s32.totalorder %s139, %s141
      %p148 = scmp.eq.s32.totalorder %s26, 1
      %p149 = por %p147, %p148
      %p150 = scmp.ne.s32.totalorder %s141, %s142
      %p151 = scmp.eq.s32.totalorder %s26, 0
      %p152 = por %p150, %p151
      %p153 = scmp.ne.s32.totalorder %s141, %s142
      %p154 = scmp.eq.s32.totalorder %s27, 1
      %p155 = por %p153, %p154
      %p157 = scmp.ne.s32.totalorder %s142, %s156
      %p158 = scmp.eq.s32.totalorder %s27, 0
      %p159 = por %p157, %p158
      %s161 = sadd.s32 %s160, 1
      %p164 = scmp.eq.s32.totalorder %s21, 1
      %p165 = scmp.ne.s32.totalorder %s160, %s162
      %p166 = scmp.eq.s32.totalorder %s21, 0
      %p167 = por %p165, %p166
      %p168 = scmp.ne.s32.totalorder %s160, %s162
      %p169 = scmp.eq.s32.totalorder %s26, 1
      %p170 = por %p168, %p169
      %p171 = scmp.ne.s32.totalorder %s162, %s163
      %p172 = scmp.eq.s32.totalorder %s26, 0
      %p173 = por %p171, %p172
      %p174 = scmp.ne.s32.totalorder %s162, %s163
      %p175 = scmp.eq.s32.totalorder %s27, 1
      %p176 = por %p174, %p175
      %p178 = scmp.ne.s32.totalorder %s163, %s177
      %p179 = scmp.eq.s32.totalorder %s27, 0
      %p180 = por %p178, %p179
      %s182 = sadd.s32 %s181, 1
      %p185 = scmp.eq.s32.totalorder %s21, 1
      %p186 = scmp.ne.s32.totalorder %s181, %s183
      %p187 = scmp.eq.s32.totalorder %s21, 0
      %p188 = por %p186, %p187
      %p189 = scmp.ne.s32.totalorder %s181, %s183
      %p190 = scmp.eq.s32.totalorder %s26, 1
      %p191 = por %p189, %p190
      %p192 = scmp.ne.s32.totalorder %s183, %s184
      %p193 = scmp.eq.s32.totalorder %s26, 0
      %p194 = por %p192, %p193
      %p195 = scmp.ne.s32.totalorder %s183, %s184
      %p196 = scmp.eq.s32.totalorder %s27, 1
      %p197 = por %p195, %p196
      %p199 = scmp.ne.s32.totalorder %s184, %s198
      %p200 = scmp.eq.s32.totalorder %s27, 0
      %p201 = por %p199, %p200
      %s203 = sadd.s32 %s202, 1
      %p206 = scmp.eq.s32.totalorder %s21, 1
      %p207 = scmp.ne.s32.totalorder %s202, %s204
      %p208 = scmp.eq.s32.totalorder %s21, 0
      %p209 = por %p207, %p208
      %p210 = scmp.ne.s32.totalorder %s202, %s204
      %p211 = scmp.eq.s32.totalorder %s26, 1
      %p212 = por %p210, %p211
      %p213 = scmp.ne.s32.totalorder %s204, %s205
      %p214 = scmp.eq.s32.totalorder %s26, 0
      %p215 = por %p213, %p214
      %p216 = scmp.ne.s32.totalorder %s204, %s205
      %p217 = scmp.eq.s32.totalorder %s27, 1
      %p218 = por %p216, %p217
      %p220 = scmp.ne.s32.totalorder %s205, %s219
      %p221 = scmp.eq.s32.totalorder %s27, 0
      %p222 = por %p220, %p221
      %s224 = sadd.s32 %s223, 1
      %p227 = scmp.eq.s32.totalorder %s21, 1
      %p228 = scmp.ne.s32.totalorder %s223, %s225
      %p229 = scmp.eq.s32.totalorder %s21, 0
      %p230 = por %p228, %p229
      %p231 = scmp.ne.s32.totalorder %s223, %s225
      %p232 = scmp.eq.s32.totalorder %s26, 1
      %p233 = por %p231, %p232
      %p234 = scmp.ne.s32.totalorder %s225, %s226
      %p235 = scmp.eq.s32.totalorder %s26, 0
      %p236 = por %p234, %p235
      %p237 = scmp.ne.s32.totalorder %s225, %s226
      %p238 = scmp.eq.s32.totalorder %s27, 1
      %p239 = por %p237, %p238
      %p241 = scmp.ne.s32.totalorder %s226, %s240
      %p242 = scmp.eq.s32.totalorder %s27, 0
      %p243 = por %p241, %p242
      %s245 = sadd.s32 %s244, 1
      %p248 = scmp.eq.s32.totalorder %s21, 1
      %p249 = scmp.ne.s32.totalorder %s244, %s246
      %p250 = scmp.eq.s32.totalorder %s21, 0
      %p251 = por %p249, %p250
      %p252 = scmp.ne.s32.totalorder %s244, %s246
      %p253 = scmp.eq.s32.totalorder %s26, 1
      %p254 = por %p252, %p253
      %p255 = scmp.ne.s32.totalorder %s246, %s247
      %p256 = scmp.eq.s32.totalorder %s26, 0
      %p257 = por %p255, %p256
      %p258 = scmp.ne.s32.totalorder %s246, %s247
      %p259 = scmp.eq.s32.totalorder %s27, 1
      %p260 = por %p258, %p259
      %p262 = scmp.ne.s32.totalorder %s247, %s261
      %p263 = scmp.eq.s32.totalorder %s27, 0
      %p264 = por %p262, %p263
      %s266 = sadd.s32 %s265, 1
      %p269 = scmp.eq.s32.totalorder %s21, 1
      %p270 = scmp.ne.s32.totalorder %s265, %s267
      %p271 = scmp.eq.s32.totalorder %s21, 0
      %p272 = por %p270, %p271
      %p273 = scmp.ne.s32.totalorder %s265, %s267
      %p274 = scmp.eq.s32.totalorder %s26, 1
      %p275 = por %p273, %p274
      %p276 = scmp.ne.s32.totalorder %s267, %s268
      %p277 = scmp.eq.s32.totalorder %s26, 0
      %p278 = por %p276, %p277
      %p279 = scmp.ne.s32.totalorder %s267, %s268
      %p280 = scmp.eq.s32.totalorder %s27, 1
      %p281 = por %p279, %p280
      %p283 = scmp.ne.s32.totalorder %s268, %s282
      %p284 = scmp.eq.s32.totalorder %s27, 0
      %p285 = por %p283, %p284
      %s286 = ssub.s32 %s21, %s28
      %p287 = scmp.eq.s32.totalorder %s286, 0
      %s289 = sadd.s32 %s288, 1
      %s290 = scalar_select %p287, %s288, %s289
      %p293 = pneg %p287
      %p294 = scmp.eq.s32.totalorder %s21, 1
      %p295 = por %p293, %p294
      %p296 = scmp.ne.s32.totalorder %s288, %s291
      %p297 = scmp.eq.s32.totalorder %s21, 0
      %p298 = por %p296, %p297
      %p299 = scmp.ne.s32.totalorder %s288, %s291
      %p300 = scmp.eq.s32.totalorder %s26, 1
      %p301 = por %p299, %p300
      %p302 = scmp.ne.s32.totalorder %s291, %s292
      %p303 = scmp.eq.s32.totalorder %s26, 0
      %p304 = por %p302, %p303
      %p305 = scmp.ne.s32.totalorder %s291, %s292
      %p306 = scmp.eq.s32.totalorder %s27, 1
      %p307 = por %p305, %p306
      %p309 = scmp.ne.s32.totalorder %s292, %s308
      %p310 = scmp.eq.s32.totalorder %s27, 0
      %p311 = por %p309, %p310
      %p312 = scmp.le.s32.totalorder 1, %s21
      %p313 = scmp.lt.s32.totalorder %s21, 3
      %p314 = pnand %p312, %p313
      %p315 = pneg %p314
      // Predicated region
      $region9: #{example_net_forward.1} parent=5 // pred_check
        _
      $region10: #{example_net_forward.1} parent=5 // pred_check_branch
        %317 = sbr.rel (%p314) target = $region12
      $region11: #{example_net_forward.1} parent=5 // pred_region
        %s318 = ssub.s32 %s21, 1
        // Predicated region
        $region13: #{example_net_forward.1} parent=11 // pred_check
          %p319 = pneg %p68
        $region14: #{example_net_forward.1} parent=11 // pred_check_branch
          %321 = sbr.rel (%p319) target = $region16
        $region15: #{example_net_forward.1} parent=11 // pred_region
          _
        $region16: #{example_net_forward.1} parent=11 // pred_fallthru
          _
        // Predicated region
        $region17: #{example_net_forward.1} parent=11 // pred_check
          %p322 = pneg %p89
        $region18: #{example_net_forward.1} parent=11 // pred_check_branch
          %324 = sbr.rel (%p322) target = $region20
        $region19: #{example_net_forward.1} parent=11 // pred_region
          _
        $region20: #{example_net_forward.1} parent=11 // pred_fallthru
          _
        // Predicated region
        $region21: #{example_net_forward.1} parent=11 // pred_check
          %p325 = pneg %p110
        $region22: #{example_net_forward.1} parent=11 // pred_check_branch
          %327 = sbr.rel (%p325) target = $region24
        $region23: #{example_net_forward.1} parent=11 // pred_region
          _
        $region24: #{example_net_forward.1} parent=11 // pred_fallthru
          _
        // Predicated region
        $region25: #{example_net_forward.1} parent=11 // pred_check
          %p328 = pneg %p131
        $region26: #{example_net_forward.1} parent=11 // pred_check_branch
          %330 = sbr.rel (%p328) target = $region28
        $region27: #{example_net_forward.1} parent=11 // pred_region
          _
        $region28: #{example_net_forward.1} parent=11 // pred_fallthru
          _
        // Predicated region
        $region29: #{example_net_forward.1} parent=11 // pred_check
          %p331 = pneg %p152
        $region30: #{example_net_forward.1} parent=11 // pred_check_branch
          %333 = sbr.rel (%p331) target = $region32
        $region31: #{example_net_forward.1} parent=11 // pred_region
          _
        $region32: #{example_net_forward.1} parent=11 // pred_fallthru
          _
        // Predicated region
        $region33: #{example_net_forward.1} parent=11 // pred_check
          %p334 = pneg %p173
        $region34: #{example_net_forward.1} parent=11 // pred_check_branch
          %336 = sbr.rel (%p334) target = $region36
        $region35: #{example_net_forward.1} parent=11 // pred_region
          _
        $region36: #{example_net_forward.1} parent=11 // pred_fallthru
          _
        // Predicated region
        $region37: #{example_net_forward.1} parent=11 // pred_check
          %p337 = pneg %p194
        $region38: #{example_net_forward.1} parent=11 // pred_check_branch
          %339 = sbr.rel (%p337) target = $region40
        $region39: #{example_net_forward.1} parent=11 // pred_region
          _
        $region40: #{example_net_forward.1} parent=11 // pred_fallthru
          _
        // Predicated region
        $region41: #{example_net_forward.1} parent=11 // pred_check
          %p340 = pneg %p215
        $region42: #{example_net_forward.1} parent=11 // pred_check_branch
          %342 = sbr.rel (%p340) target = $region44
        $region43: #{example_net_forward.1} parent=11 // pred_region
          _
        $region44: #{example_net_forward.1} parent=11 // pred_fallthru
          _
        // Predicated region
        $region45: #{example_net_forward.1} parent=11 // pred_check
          %p343 = pneg %p236
        $region46: #{example_net_forward.1} parent=11 // pred_check_branch
          %345 = sbr.rel (%p343) target = $region48
        $region47: #{example_net_forward.1} parent=11 // pred_region
          _
        $region48: #{example_net_forward.1} parent=11 // pred_fallthru
          _
        // Predicated region
        $region49: #{example_net_forward.1} parent=11 // pred_check
          %p346 = pneg %p257
        $region50: #{example_net_forward.1} parent=11 // pred_check_branch
          %348 = sbr.rel (%p346) target = $region52
        $region51: #{example_net_forward.1} parent=11 // pred_region
          _
        $region52: #{example_net_forward.1} parent=11 // pred_fallthru
          _
        // Predicated region
        $region53: #{example_net_forward.1} parent=11 // pred_check
          %p349 = pneg %p278
        $region54: #{example_net_forward.1} parent=11 // pred_check_branch
          %351 = sbr.rel (%p349) target = $region56
        $region55: #{example_net_forward.1} parent=11 // pred_region
          _
        $region56: #{example_net_forward.1} parent=11 // pred_fallthru
          _
      $region12: #{example_net_forward.1} parent=5 // pred_fallthru
        _
      %p352 = scmp.lt.s32.totalorder %s21, 2
      // Predicated region
      $region57: #{example_net_forward.1} parent=5 // pred_check
        %p353 = pneg %p352
      $region58: #{example_net_forward.1} parent=5 // pred_check_branch
        %355 = sbr.rel (%p353) target = $region60
      $region59: #{example_net_forward.1} parent=5 // pred_region
        // Predicated region
        $region61: #{example_net_forward.1} parent=59 // pred_check
          %p356 = pneg %p41
        $region62: #{example_net_forward.1} parent=59 // pred_check_branch
          %358 = sbr.rel (%p356) target = $region64
        $region63: #{example_net_forward.1} parent=59 // pred_region
          %p359 = scmp.lt.s32.totalorder %s21, 1
          %s360 = scalar_select %p359, %s21, 1
          %s361 = smul.addr %s360, 2
          %s362 = smul.addr %s361, 8
          %s363 = scalar_lea.vmem %s0, %s362
        $region64: #{example_net_forward.1} parent=59 // pred_fallthru
          _
      $region60: #{example_net_forward.1} parent=5 // pred_fallthru
        _
      %p364 = scmp.le.s32.totalorder 1, %s21
      %p365 = scmp.lt.s32.totalorder %s21, 3
      %p366 = pnand %p364, %p365
      %p367 = pneg %p366
      // Predicated region
      $region65: #{example_net_forward.1} parent=5 // pred_check
        _
      $region66: #{example_net_forward.1} parent=5 // pred_check_branch
        %369 = sbr.rel (%p366) target = $region68
      $region67: #{example_net_forward.1} parent=5 // pred_region
        %s370 = ssub.s32 %s21, 1
        %p371 = scmp.lt.s32.totalorder %s26, 1
        %s372 = scalar_select %p371, %s26, 1
        %s373 = smul.addr %s372, 2
        %s374 = smul.addr %s373, 8
        %s375 = scalar_lea.vmem %s0, %s374
        %p376 = pneg %p47
        %p377 = pneg %p44
        %p378 = pneg %p68
        %p379 = pneg %p65
        %p380 = pneg %p89
        %p381 = pneg %p86
        %p382 = pneg %p110
        %p383 = pneg %p107
        %p384 = pneg %p131
        %p385 = pneg %p128
        %p386 = pneg %p152
        %p387 = pneg %p149
        %p388 = pneg %p173
        %p389 = pneg %p170
        %p390 = pneg %p194
        %p391 = pneg %p191
        %p392 = pneg %p215
        %p393 = pneg %p212
        %p394 = pneg %p236
        %p395 = pneg %p233
        %p396 = pneg %p257
        %p397 = pneg %p254
        %p398 = pneg %p278
        %p399 = pneg %p275
        %p400 = pneg %p304
        %p401 = pneg %p301
        %s402 = sand.u32 %s291, 1
        %s403 = scalar_lea.sflag [#allocation3], %s402
        %s404 = sand.u32 %s291, 1
        %s405 = scalar_lea.vmem [#allocation2], %s404
        %p406 = scmp.lt.s32.totalorder %s26, 1
        %s407 = scalar_select %p406, %s26, 1
        %s408 = smul.addr %s407, 2
        %s409 = smul.addr %s408, 8
        %s410 = scalar_lea.vmem %s0, %s409
        %v411 = vld [vmem:[%s410] sm:$0xff]
        %v412 = vld [vmem:[%s410 + $0x8] sm:$0xff]
        %v413 = vld [vmem:[%s1] sm:$0xff]
        %v414 = vld [vmem:[%s1 + $0x8] sm:$0xff]
        %v415 = vld [vmem:[%s1 + $0x10] sm:$0xff]
        %v416 = vld [vmem:[%s1 + $0x18] sm:$0xff]
        %v417 = vld [vmem:[%s1 + $0x20] sm:$0xff]
        %v418 = vld [vmem:[%s1 + $0x28] sm:$0xff]
        %v419 = vld [vmem:[%s1 + $0x30] sm:$0xff]
        %v420 = vld [vmem:[%s1 + $0x38] sm:$0xff]
        %v421 = vld [vmem:[%s1 + $0x40] sm:$0xff]
        %v422 = vld [vmem:[%s1 + $0x48] sm:$0xff]
        %v423 = vld [vmem:[%s1 + $0x50] sm:$0xff]
        %v424 = vld [vmem:[%s1 + $0x58] sm:$0xff]
        %s425 = scalar_lea.vmem %s1, 96
        %v426 = vld [vmem:[%s425] sm:$0xff]
        %v427 = vld [vmem:[%s425 + $0x8] sm:$0xff]
        %v428 = vld [vmem:[%s425 + $0x10] sm:$0xff]
        %v429 = vld [vmem:[%s425 + $0x18] sm:$0xff]
        %v430 = vld [vmem:[%s425 + $0x20] sm:$0xff]
        %v431 = vld [vmem:[%s425 + $0x28] sm:$0xff]
        %v432 = vld [vmem:[%s425 + $0x30] sm:$0xff]
        %v433 = vld [vmem:[%s425 + $0x38] sm:$0xff]
        %v434 = vld [vmem:[%s425 + $0x40] sm:$0xff]
        %v435 = vld [vmem:[%s425 + $0x48] sm:$0xff]
        %v436 = vld [vmem:[%s425 + $0x50] sm:$0xff]
        %v437 = vld [vmem:[%s425 + $0x58] sm:$0xff]
        %vm438 = vcmask 392192
        %v440 = vsel %vm438, %v412, 0
        %442 = vmatprep.subr.mxu0 0.0
        %443 = vmatpush1.msra.mxu0 0.0
        %444 = vmatprep.subr.mxu0 0.0
        %445 = vmatpush1.msra.mxu0 0.0
        %446 = vmatprep.subr.mxu0 0.0
        %447 = vmatpush1.msra.mxu0 0.0
        %448 = vmatprep.subr.mxu0 0.0
        %449 = vmatpush1.msra.mxu0 0.0
        %450 = vmatprep.subr.mxu0 0.0
        %451 = vmatpush1.msra.mxu0 0.0
        %452 = vmatprep.subr.mxu0 0.0
        %453 = vmatpush1.msra.mxu0 0.0
        %454 = vmatprep.subr.mxu0 0.0
        %455 = vmatpush1.msra.mxu0 0.0
        %456 = vmatprep.subr.mxu0 0.0
        %457 = vmatpush1.msra.mxu0 0.0
        %458 = vmatprep.subr.mxu0 0.0
        %459 = vmatpush1.msra.mxu0 0.0
        %460 = vmatprep.subr.mxu0 0.0
        %461 = vmatpush1.msra.mxu0 0.0
        %462 = vmatprep.subr.mxu0 %v437
        %463 = vmatpush1.msra.mxu0 %v436
        %464 = vmatprep.subr.mxu0 %v435
        %465 = vmatpush1.msra.mxu0 %v434
        %466 = vmatprep.subr.mxu0 %v433
        %467 = vmatpush1.msra.mxu0 %v432
        %468 = vmatprep.subr.mxu0 %v431
        %469 = vmatpush1.msra.mxu0 %v430
        %470 = vmatprep.subr.mxu0 %v429
        %471 = vmatpush1.msra.mxu0 %v428
        %472 = vmatprep.subr.mxu0 %v427
        %473 = vmatpush1.msra.mxu0 %v426
        %474 = vmatprep.subr.mxu0 0.0
        %475 = vmatpush2.msra.mxu0 0.0
        %476 = vmatprep.subr.mxu0 0.0
        %477 = vmatpush2.msra.mxu0 0.0
        %478 = vmatprep.subr.mxu0 0.0
        %479 = vmatpush2.msra.mxu0 0.0
        %480 = vmatprep.subr.mxu0 0.0
        %481 = vmatpush2.msra.mxu0 0.0
        %482 = vmatprep.subr.mxu0 0.0
        %483 = vmatpush2.msra.mxu0 0.0
        %484 = vmatprep.subr.mxu0 0.0
        %485 = vmatpush2.msra.mxu0 0.0
        %486 = vmatprep.subr.mxu0 0.0
        %487 = vmatpush2.msra.mxu0 0.0
        %488 = vmatprep.subr.mxu0 0.0
        %489 = vmatpush2.msra.mxu0 0.0
        %490 = vmatprep.subr.mxu0 0.0
        %491 = vmatpush2.msra.mxu0 0.0
        %492 = vmatprep.subr.mxu0 0.0
        %493 = vmatpush2.msra.mxu0 0.0
        %494 = vmatprep.subr.mxu0 0.0
        %495 = vmatpush2.msra.mxu0 0.0
        %496 = vmatprep.subr.mxu0 0.0
        %497 = vmatpush2.msra.mxu0 0.0
        %498 = vmatprep.subr.mxu0 0.0
        %499 = vmatpush2.msra.mxu0 0.0
        %500 = vmatprep.subr.mxu0 0.0
        %501 = vmatpush2.msra.mxu0 0.0
        %502 = vmatprep.subr.mxu0 0.0
        %503 = vmatpush2.msra.mxu0 0.0
        %504 = vmatprep.subr.mxu0 0.0
        %505 = vmatpush2.msra.mxu0 0.0
        %506 = vmatprep.mubr.f32.mxu0 0.0
        %507 = vmatmul.mubr.f32.gmra.mxu0 %v440
        %v508 = vpop.f32.mrf.mxu0
        %v509 = vadd.f32 0.0, %v508
        %v510 = vpop.f32.mrf.mxu0
        %v511 = vadd.f32 0.0, %v510
        %512 = vdwg.mxu0
        %v514 = vsel %vm438, %v411, 0
        %516 = vmatprep.subr.mxu0 0.0
        %517 = vmatpush1.msra.mxu0 0.0
        %518 = vmatprep.subr.mxu0 0.0
        %519 = vmatpush1.msra.mxu0 0.0
        %520 = vmatprep.subr.mxu0 0.0
        %521 = vmatpush1.msra.mxu0 0.0
        %522 = vmatprep.subr.mxu0 0.0
        %523 = vmatpush1.msra.mxu0 0.0
        %524 = vmatprep.subr.mxu0 0.0
        %525 = vmatpush1.msra.mxu0 0.0
        %526 = vmatprep.subr.mxu0 0.0
        %527 = vmatpush1.msra.mxu0 0.0
        %528 = vmatprep.subr.mxu0 0.0
        %529 = vmatpush1.msra.mxu0 0.0
        %530 = vmatprep.subr.mxu0 0.0
        %531 = vmatpush1.msra.mxu0 0.0
        %532 = vmatprep.subr.mxu0 0.0
        %533 = vmatpush1.msra.mxu0 0.0
        %534 = vmatprep.subr.mxu0 0.0
        %535 = vmatpush1.msra.mxu0 0.0
        %536 = vmatprep.subr.mxu0 %v424
        %537 = vmatpush1.msra.mxu0 %v423
        %538 = vmatprep.subr.mxu0 %v422
        %539 = vmatpush1.msra.mxu0 %v421
        %540 = vmatprep.subr.mxu0 %v420
        %541 = vmatpush1.msra.mxu0 %v419
        %542 = vmatprep.subr.mxu0 %v418
        %543 = vmatpush1.msra.mxu0 %v417
        %544 = vmatprep.subr.mxu0 %v416
        %545 = vmatpush1.msra.mxu0 %v415
        %546 = vmatprep.subr.mxu0 %v414
        %547 = vmatpush1.msra.mxu0 %v413
        %548 = vmatprep.subr.mxu0 0.0
        %549 = vmatpush2.msra.mxu0 0.0
        %550 = vmatprep.subr.mxu0 0.0
        %551 = vmatpush2.msra.mxu0 0.0
        %552 = vmatprep.subr.mxu0 0.0
        %553 = vmatpush2.msra.mxu0 0.0
        %554 = vmatprep.subr.mxu0 0.0
        %555 = vmatpush2.msra.mxu0 0.0
        %556 = vmatprep.subr.mxu0 0.0
        %557 = vmatpush2.msra.mxu0 0.0
        %558 = vmatprep.subr.mxu0 0.0
        %559 = vmatpush2.msra.mxu0 0.0
        %560 = vmatprep.subr.mxu0 0.0
        %561 = vmatpush2.msra.mxu0 0.0
        %562 = vmatprep.subr.mxu0 0.0
        %563 = vmatpush2.msra.mxu0 0.0
        %564 = vmatprep.subr.mxu0 0.0
        %565 = vmatpush2.msra.mxu0 0.0
        %566 = vmatprep.subr.mxu0 0.0
        %567 = vmatpush2.msra.mxu0 0.0
        %568 = vmatprep.subr.mxu0 0.0
        %569 = vmatpush2.msra.mxu0 0.0
        %570 = vmatprep.subr.mxu0 0.0
        %571 = vmatpush2.msra.mxu0 0.0
        %572 = vmatprep.subr.mxu0 0.0
        %573 = vmatpush2.msra.mxu0 0.0
        %574 = vmatprep.subr.mxu0 0.0
        %575 = vmatpush2.msra.mxu0 0.0
        %576 = vmatprep.subr.mxu0 0.0
        %577 = vmatpush2.msra.mxu0 0.0
        %578 = vmatprep.subr.mxu0 0.0
        %579 = vmatpush2.msra.mxu0 0.0
        %580 = vmatprep.mubr.f32.mxu0 0.0
        %581 = vmatmul.mubr.f32.gmra.mxu0 %v514
        %v582 = vpop.f32.mrf.mxu0
        %v583 = vadd.f32 %v509, %v582
        %v584 = vpop.f32.mrf.mxu0
        %v585 = vadd.f32 %v511, %v584
        %586 = vdwg.mxu0
        %s587 = scalar_lea.vmem %s1, 192
        %v588 = vld [vmem:[%s587] sm:$0xff]
        %v589 = vld [vmem:[%s587 + $0x8] sm:$0xff]
        %v590 = vld [vmem:[%s587 + $0x10] sm:$0xff]
        %v591 = vld [vmem:[%s587 + $0x18] sm:$0xff]
        %v592 = vld [vmem:[%s587 + $0x20] sm:$0xff]
        %v593 = vld [vmem:[%s587 + $0x28] sm:$0xff]
        %v594 = vld [vmem:[%s587 + $0x30] sm:$0xff]
        %v595 = vld [vmem:[%s587 + $0x38] sm:$0xff]
        %v596 = vld [vmem:[%s587 + $0x40] sm:$0xff]
        %v597 = vld [vmem:[%s587 + $0x48] sm:$0xff]
        %v598 = vld [vmem:[%s587 + $0x50] sm:$0xff]
        %v599 = vld [vmem:[%s587 + $0x58] sm:$0xff]
        %v600 = vrot.slane %v411, 1
        %v601 = vsel %vm438, %v600, 0
        %603 = vmatprep.subr.mxu0 0.0
        %604 = vmatpush1.msra.mxu0 0.0
        %605 = vmatprep.subr.mxu0 0.0
        %606 = vmatpush1.msra.mxu0 0.0
        %607 = vmatprep.subr.mxu0 0.0
        %608 = vmatpush1.msra.mxu0 0.0
        %609 = vmatprep.subr.mxu0 0.0
        %610 = vmatpush1.msra.mxu0 0.0
        %611 = vmatprep.subr.mxu0 0.0
        %612 = vmatpush1.msra.mxu0 0.0
        %613 = vmatprep.subr.mxu0 0.0
        %614 = vmatpush1.msra.mxu0 0.0
        %615 = vmatprep.subr.mxu0 0.0
        %616 = vmatpush1.msra.mxu0 0.0
        %617 = vmatprep.subr.mxu0 0.0
        %618 = vmatpush1.msra.mxu0 0.0
        %619 = vmatprep.subr.mxu0 0.0
        %620 = vmatpush1.msra.mxu0 0.0
        %621 = vmatprep.subr.mxu0 0.0
        %622 = vmatpush1.msra.mxu0 0.0
        %623 = vmatprep.subr.mxu0 %v599
        %624 = vmatpush1.msra.mxu0 %v598
        %625 = vmatprep.subr.mxu0 %v597
        %626 = vmatpush1.msra.mxu0 %v596
        %627 = vmatprep.subr.mxu0 %v595
        %628 = vmatpush1.msra.mxu0 %v594
        %629 = vmatprep.subr.mxu0 %v593
        %630 = vmatpush1.msra.mxu0 %v592
        %631 = vmatprep.subr.mxu0 %v591
        %632 = vmatpush1.msra.mxu0 %v590
        %633 = vmatprep.subr.mxu0 %v589
        %634 = vmatpush1.msra.mxu0 %v588
        %635 = vmatprep.subr.mxu0 0.0
        %636 = vmatpush2.msra.mxu0 0.0
        %637 = vmatprep.subr.mxu0 0.0
        %638 = vmatpush2.msra.mxu0 0.0
        %639 = vmatprep.subr.mxu0 0.0
        %640 = vmatpush2.msra.mxu0 0.0
        %641 = vmatprep.subr.mxu0 0.0
        %642 = vmatpush2.msra.mxu0 0.0
        %643 = vmatprep.subr.mxu0 0.0
        %644 = vmatpush2.msra.mxu0 0.0
        %645 = vmatprep.subr.mxu0 0.0
        %646 = vmatpush2.msra.mxu0 0.0
        %647 = vmatprep.subr.mxu0 0.0
        %648 = vmatpush2.msra.mxu0 0.0
        %649 = vmatprep.subr.mxu0 0.0
        %650 = vmatpush2.msra.mxu0 0.0
        %651 = vmatprep.subr.mxu0 0.0
        %652 = vmatpush2.msra.mxu0 0.0
        %653 = vmatprep.subr.mxu0 0.0
        %654 = vmatpush2.msra.mxu0 0.0
        %655 = vmatprep.subr.mxu0 0.0
        %656 = vmatpush2.msra.mxu0 0.0
        %657 = vmatprep.subr.mxu0 0.0
        %658 = vmatpush2.msra.mxu0 0.0
        %659 = vmatprep.subr.mxu0 0.0
        %660 = vmatpush2.msra.mxu0 0.0
        %661 = vmatprep.subr.mxu0 0.0
        %662 = vmatpush2.msra.mxu0 0.0
        %663 = vmatprep.subr.mxu0 0.0
        %664 = vmatpush2.msra.mxu0 0.0
        %665 = vmatprep.subr.mxu0 0.0
        %666 = vmatpush2.msra.mxu0 0.0
        %667 = vmatprep.mubr.f32.mxu0 0.0
        %668 = vmatmul.mubr.f32.gmra.mxu0 %v601
        %v669 = vpop.f32.mrf.mxu0
        %v670 = vadd.f32 0.0, %v669
        %v671 = vpop.f32.mrf.mxu0
        %v672 = vadd.f32 0.0, %v671
        %673 = vdwg.mxu0
        %v674 = vadd.f32 %v583, %v670
        %v675 = vadd.f32 %v585, %v672
        %676 = vmatprep.subr.mxu0 0.0
        %677 = vmatpush1.msra.mxu0 0.0
        %678 = vmatprep.subr.mxu0 0.0
        %679 = vmatpush1.msra.mxu0 0.0
        %680 = vmatprep.subr.mxu0 0.0
        %681 = vmatpush1.msra.mxu0 0.0
        %682 = vmatprep.subr.mxu0 0.0
        %683 = vmatpush1.msra.mxu0 0.0
        %684 = vmatprep.subr.mxu0 0.0
        %685 = vmatpush1.msra.mxu0 0.0
        %686 = vmatprep.subr.mxu0 0.0
        %687 = vmatpush1.msra.mxu0 0.0
        %688 = vmatprep.subr.mxu0 0.0
        %689 = vmatpush1.msra.mxu0 0.0
        %690 = vmatprep.subr.mxu0 0.0
        %691 = vmatpush1.msra.mxu0 0.0
        %692 = vmatprep.subr.mxu0 0.0
        %693 = vmatpush1.msra.mxu0 0.0
        %694 = vmatprep.subr.mxu0 0.0
        %695 = vmatpush1.msra.mxu0 0.0
        %696 = vmatprep.subr.mxu0 %v437
        %697 = vmatpush1.msra.mxu0 %v436
        %698 = vmatprep.subr.mxu0 %v435
        %699 = vmatpush1.msra.mxu0 %v434
        %700 = vmatprep.subr.mxu0 %v433
        %701 = vmatpush1.msra.mxu0 %v432
        %702 = vmatprep.subr.mxu0 %v431
        %703 = vmatpush1.msra.mxu0 %v430
        %704 = vmatprep.subr.mxu0 %v429
        %705 = vmatpush1.msra.mxu0 %v428
        %706 = vmatprep.subr.mxu0 %v427
        %707 = vmatpush1.msra.mxu0 %v426
        %708 = vmatprep.subr.mxu0 0.0
        %709 = vmatpush2.msra.mxu0 0.0
        %710 = vmatprep.subr.mxu0 0.0
        %711 = vmatpush2.msra.mxu0 0.0
        %712 = vmatprep.subr.mxu0 0.0
        %713 = vmatpush2.msra.mxu0 0.0
        %714 = vmatprep.subr.mxu0 0.0
        %715 = vmatpush2.msra.mxu0 0.0
        %716 = vmatprep.subr.mxu0 0.0
        %717 = vmatpush2.msra.mxu0 0.0
        %718 = vmatprep.subr.mxu0 0.0
        %719 = vmatpush2.msra.mxu0 0.0
        %720 = vmatprep.subr.mxu0 0.0
        %721 = vmatpush2.msra.mxu0 0.0
        %722 = vmatprep.subr.mxu0 0.0
        %723 = vmatpush2.msra.mxu0 0.0
        %724 = vmatprep.subr.mxu0 0.0
        %725 = vmatpush2.msra.mxu0 0.0
        %726 = vmatprep.subr.mxu0 0.0
        %727 = vmatpush2.msra.mxu0 0.0
        %728 = vmatprep.subr.mxu0 0.0
        %729 = vmatpush2.msra.mxu0 0.0
        %730 = vmatprep.subr.mxu0 0.0
        %731 = vmatpush2.msra.mxu0 0.0
        %732 = vmatprep.subr.mxu0 0.0
        %733 = vmatpush2.msra.mxu0 0.0
        %734 = vmatprep.subr.mxu0 0.0
        %735 = vmatpush2.msra.mxu0 0.0
        %736 = vmatprep.subr.mxu0 0.0
        %737 = vmatpush2.msra.mxu0 0.0
        %738 = vmatprep.subr.mxu0 0.0
        %739 = vmatpush2.msra.mxu0 0.0
        %740 = vmatprep.mubr.f32.mxu0 0.0
        %741 = vmatmul.mubr.f32.gmra.mxu0 %v601
        %v742 = vpop.f32.mrf.mxu0
        %v743 = vadd.f32 0.0, %v742
        %v744 = vpop.f32.mrf.mxu0
        %v745 = vadd.f32 0.0, %v744
        %746 = vdwg.mxu0
        %747 = vmatprep.subr.mxu0 0.0
        %748 = vmatpush1.msra.mxu0 0.0
        %749 = vmatprep.subr.mxu0 0.0
        %750 = vmatpush1.msra.mxu0 0.0
        %751 = vmatprep.subr.mxu0 0.0
        %752 = vmatpush1.msra.mxu0 0.0
        %753 = vmatprep.subr.mxu0 0.0
        %754 = vmatpush1.msra.mxu0 0.0
        %755 = vmatprep.subr.mxu0 0.0
        %756 = vmatpush1.msra.mxu0 0.0
        %757 = vmatprep.subr.mxu0 0.0
        %758 = vmatpush1.msra.mxu0 0.0
        %759 = vmatprep.subr.mxu0 0.0
        %760 = vmatpush1.msra.mxu0 0.0
        %761 = vmatprep.subr.mxu0 0.0
        %762 = vmatpush1.msra.mxu0 0.0
        %763 = vmatprep.subr.mxu0 0.0
        %764 = vmatpush1.msra.mxu0 0.0
        %765 = vmatprep.subr.mxu0 0.0
        %766 = vmatpush1.msra.mxu0 0.0
        %767 = vmatprep.subr.mxu0 %v424
        %768 = vmatpush1.msra.mxu0 %v423
        %769 = vmatprep.subr.mxu0 %v422
        %770 = vmatpush1.msra.mxu0 %v421
        %771 = vmatprep.subr.mxu0 %v420
        %772 = vmatpush1.msra.mxu0 %v419
        %773 = vmatprep.subr.mxu0 %v418
        %774 = vmatpush1.msra.mxu0 %v417
        %775 = vmatprep.subr.mxu0 %v416
        %776 = vmatpush1.msra.mxu0 %v415
        %777 = vmatprep.subr.mxu0 %v414
        %778 = vmatpush1.msra.mxu0 %v413
        %779 = vmatprep.subr.mxu0 0.0
        %780 = vmatpush2.msra.mxu0 0.0
        %781 = vmatprep.subr.mxu0 0.0
        %782 = vmatpush2.msra.mxu0 0.0
        %783 = vmatprep.subr.mxu0 0.0
        %784 = vmatpush2.msra.mxu0 0.0
        %785 = vmatprep.subr.mxu0 0.0
        %786 = vmatpush2.msra.mxu0 0.0
        %787 = vmatprep.subr.mxu0 0.0
        %788 = vmatpush2.msra.mxu0 0.0
        %789 = vmatprep.subr.mxu0 0.0
        %790 = vmatpush2.msra.mxu0 0.0
        %791 = vmatprep.subr.mxu0 0.0
        %792 = vmatpush2.msra.mxu0 0.0
        %793 = vmatprep.subr.mxu0 0.0
        %794 = vmatpush2.msra.mxu0 0.0
        %795 = vmatprep.subr.mxu0 0.0
        %796 = vmatpush2.msra.mxu0 0.0
        %797 = vmatprep.subr.mxu0 0.0
        %798 = vmatpush2.msra.mxu0 0.0
        %799 = vmatprep.subr.mxu0 0.0
        %800 = vmatpush2.msra.mxu0 0.0
        %801 = vmatprep.subr.mxu0 0.0
        %802 = vmatpush2.msra.mxu0 0.0
        %803 = vmatprep.subr.mxu0 0.0
        %804 = vmatpush2.msra.mxu0 0.0
        %805 = vmatprep.subr.mxu0 0.0
        %806 = vmatpush2.msra.mxu0 0.0
        %807 = vmatprep.subr.mxu0 0.0
        %808 = vmatpush2.msra.mxu0 0.0
        %809 = vmatprep.subr.mxu0 0.0
        %810 = vmatpush2.msra.mxu0 0.0
        %811 = vmatprep.mubr.f32.mxu0 0.0
        %812 = vmatmul.mubr.f32.gmra.mxu0 %v440
        %v813 = vpop.f32.mrf.mxu0
        %v814 = vadd.f32 %v743, %v813
        %v815 = vpop.f32.mrf.mxu0
        %v816 = vadd.f32 %v745, %v815
        %817 = vdwg.mxu0
        %v818 = vrot.slane %v412, 1
        %v819 = vsel %vm438, %v818, 0
        %821 = vmatprep.subr.mxu0 0.0
        %822 = vmatpush1.msra.mxu0 0.0
        %823 = vmatprep.subr.mxu0 0.0
        %824 = vmatpush1.msra.mxu0 0.0
        %825 = vmatprep.subr.mxu0 0.0
        %826 = vmatpush1.msra.mxu0 0.0
        %827 = vmatprep.subr.mxu0 0.0
        %828 = vmatpush1.msra.mxu0 0.0
        %829 = vmatprep.subr.mxu0 0.0
        %830 = vmatpush1.msra.mxu0 0.0
        %831 = vmatprep.subr.mxu0 0.0
        %832 = vmatpush1.msra.mxu0 0.0
        %833 = vmatprep.subr.mxu0 0.0
        %834 = vmatpush1.msra.mxu0 0.0
        %835 = vmatprep.subr.mxu0 0.0
        %836 = vmatpush1.msra.mxu0 0.0
        %837 = vmatprep.subr.mxu0 0.0
        %838 = vmatpush1.msra.mxu0 0.0
        %839 = vmatprep.subr.mxu0 0.0
        %840 = vmatpush1.msra.mxu0 0.0
        %841 = vmatprep.subr.mxu0 %v599
        %842 = vmatpush1.msra.mxu0 %v598
        %843 = vmatprep.subr.mxu0 %v597
        %844 = vmatpush1.msra.mxu0 %v596
        %845 = vmatprep.subr.mxu0 %v595
        %846 = vmatpush1.msra.mxu0 %v594
        %847 = vmatprep.subr.mxu0 %v593
        %848 = vmatpush1.msra.mxu0 %v592
        %849 = vmatprep.subr.mxu0 %v591
        %850 = vmatpush1.msra.mxu0 %v590
        %851 = vmatprep.subr.mxu0 %v589
        %852 = vmatpush1.msra.mxu0 %v588
        %853 = vmatprep.subr.mxu0 0.0
        %854 = vmatpush2.msra.mxu0 0.0
        %855 = vmatprep.subr.mxu0 0.0
        %856 = vmatpush2.msra.mxu0 0.0
        %857 = vmatprep.subr.mxu0 0.0
        %858 = vmatpush2.msra.mxu0 0.0
        %859 = vmatprep.subr.mxu0 0.0
        %860 = vmatpush2.msra.mxu0 0.0
        %861 = vmatprep.subr.mxu0 0.0
        %862 = vmatpush2.msra.mxu0 0.0
        %863 = vmatprep.subr.mxu0 0.0
        %864 = vmatpush2.msra.mxu0 0.0
        %865 = vmatprep.subr.mxu0 0.0
        %866 = vmatpush2.msra.mxu0 0.0
        %867 = vmatprep.subr.mxu0 0.0
        %868 = vmatpush2.msra.mxu0 0.0
        %869 = vmatprep.subr.mxu0 0.0
        %870 = vmatpush2.msra.mxu0 0.0
        %871 = vmatprep.subr.mxu0 0.0
        %872 = vmatpush2.msra.mxu0 0.0
        %873 = vmatprep.subr.mxu0 0.0
        %874 = vmatpush2.msra.mxu0 0.0
        %875 = vmatprep.subr.mxu0 0.0
        %876 = vmatpush2.msra.mxu0 0.0
        %877 = vmatprep.subr.mxu0 0.0
        %878 = vmatpush2.msra.mxu0 0.0
        %879 = vmatprep.subr.mxu0 0.0
        %880 = vmatpush2.msra.mxu0 0.0
        %881 = vmatprep.subr.mxu0 0.0
        %882 = vmatpush2.msra.mxu0 0.0
        %883 = vmatprep.subr.mxu0 0.0
        %884 = vmatpush2.msra.mxu0 0.0
        %885 = vmatprep.mubr.f32.mxu0 0.0
        %886 = vmatmul.mubr.f32.gmra.mxu0 %v819
        %v887 = vpop.f32.mrf.mxu0
        %v888 = vadd.f32 0.0, %v887
        %v889 = vpop.f32.mrf.mxu0
        %v890 = vadd.f32 0.0, %v889
        %891 = vdwg.mxu0
        %v892 = vadd.f32 %v814, %v888
        %v893 = vadd.f32 %v816, %v890
        %v894 = vmax.f32 %v674, %v892
        %v895 = vmax.f32 %v675, %v893
        %v896 = vmax.f32 %v894, %v895
        %v897 = vld [vmem:[%s3] sm:$0x1]
        %v899 = vlaneseq
        %v900 = vshrl.u32 %v899, 7
        %v901 = vsub.s32 0, %v900
        %v902 = vrot.slane %v897, %v901
        %v904 = vadd.f32 %v896, %v902
        %v905 = vmax.f32 %v904, 0.0
        %v906 = vld [vmem:[%s2] sm:$0xff]
        %v907 = vld [vmem:[%s2 + $0x8] sm:$0xff]
        %v908 = vld [vmem:[%s2 + $0x10] sm:$0xff]
        %v909 = vld [vmem:[%s2 + $0x18] sm:$0xff]
        %v910 = vld [vmem:[%s2 + $0x20] sm:$0xff]
        %v911 = vld [vmem:[%s2 + $0x28] sm:$0xff]
        %v912 = vld [vmem:[%s2 + $0x30] sm:$0xff]
        %v913 = vld [vmem:[%s2 + $0x38] sm:$0xff]
        %v914 = vld [vmem:[%s2 + $0x40] sm:$0xff]
        %v915 = vld [vmem:[%s2 + $0x48] sm:$0xff]
        %v916 = vld [vmem:[%s2 + $0x50] sm:$0xff]
        %v917 = vld [vmem:[%s2 + $0x58] sm:$0xff]
        %v918 = vld [vmem:[%s2 + $0x60] sm:$0xff]
        %v919 = vld [vmem:[%s2 + $0x68] sm:$0xff]
        %v920 = vld [vmem:[%s2 + $0x70] sm:$0xff]
        %v921 = vld [vmem:[%s2 + $0x78] sm:$0xff]
        %v922 = vld [vmem:[%s2 + $0x80] sm:$0xff]
        %v923 = vld [vmem:[%s2 + $0x88] sm:$0xff]
        %v924 = vld [vmem:[%s2 + $0x90] sm:$0xff]
        %v925 = vld [vmem:[%s2 + $0x98] sm:$0xff]
        %v926 = vld [vmem:[%s2 + $0xa0] sm:$0xff]
        %v927 = vld [vmem:[%s2 + $0xa8] sm:$0xff]
        %v928 = vld [vmem:[%s2 + $0xb0] sm:$0xff]
        %v929 = vld [vmem:[%s2 + $0xb8] sm:$0xff]
        %v930 = vld [vmem:[%s2 + $0xc0] sm:$0xff]
        %v931 = vld [vmem:[%s2 + $0xc8] sm:$0xff]
        %v932 = vld [vmem:[%s2 + $0xd0] sm:$0xff]
        %v933 = vld [vmem:[%s2 + $0xd8] sm:$0xff]
        %v934 = vld [vmem:[%s2 + $0xe0] sm:$0xff]
        %v935 = vld [vmem:[%s2 + $0xe8] sm:$0xff]
        %v936 = vld [vmem:[%s2 + $0xf0] sm:$0xff]
        %v937 = vld [vmem:[%s2 + $0xf8] sm:$0xff]
        %s938 = scalar_lea.vmem %s2, 256
        %v939 = vld [vmem:[%s938] sm:$0xff]
        %v940 = vld [vmem:[%s938 + $0x8] sm:$0xff]
        %v941 = vld [vmem:[%s938 + $0x10] sm:$0xff]
        %v942 = vld [vmem:[%s938 + $0x18] sm:$0xff]
        %v943 = vld [vmem:[%s938 + $0x20] sm:$0xff]
        %v944 = vld [vmem:[%s938 + $0x28] sm:$0xff]
        %v945 = vld [vmem:[%s938 + $0x30] sm:$0xff]
        %v946 = vld [vmem:[%s938 + $0x38] sm:$0xff]
        %v947 = vld [vmem:[%s938 + $0x40] sm:$0xff]
        %v948 = vld [vmem:[%s938 + $0x48] sm:$0xff]
        %v949 = vld [vmem:[%s938 + $0x50] sm:$0xff]
        %v950 = vld [vmem:[%s938 + $0x58] sm:$0xff]
        %v951 = vld [vmem:[%s938 + $0x60] sm:$0xff]
        %v952 = vld [vmem:[%s938 + $0x68] sm:$0xff]
        %v953 = vld [vmem:[%s938 + $0x70] sm:$0xff]
        %v954 = vld [vmem:[%s938 + $0x78] sm:$0xff]
        %v955 = vld [vmem:[%s938 + $0x80] sm:$0xff]
        %v956 = vld [vmem:[%s938 + $0x88] sm:$0xff]
        %v957 = vld [vmem:[%s938 + $0x90] sm:$0xff]
        %v958 = vld [vmem:[%s938 + $0x98] sm:$0xff]
        %v959 = vld [vmem:[%s938 + $0xa0] sm:$0xff]
        %v960 = vld [vmem:[%s938 + $0xa8] sm:$0xff]
        %v961 = vld [vmem:[%s938 + $0xb0] sm:$0xff]
        %v962 = vld [vmem:[%s938 + $0xb8] sm:$0xff]
        %v963 = vld [vmem:[%s938 + $0xc0] sm:$0xff]
        %v964 = vld [vmem:[%s938 + $0xc8] sm:$0xff]
        %v965 = vld [vmem:[%s938 + $0xd0] sm:$0xff]
        %v966 = vld [vmem:[%s938 + $0xd8] sm:$0xff]
        %v967 = vld [vmem:[%s938 + $0xe0] sm:$0xff]
        %v968 = vld [vmem:[%s938 + $0xe8] sm:$0xff]
        %v969 = vld [vmem:[%s938 + $0xf0] sm:$0xff]
        %v970 = vld [vmem:[%s938 + $0xf8] sm:$0xff]
        %v972 = vrot.slane %v905, 1
        %974 = vmatprep.subr.mxu0 %v970
        %975 = vmatpush1.msra.mxu0 %v969
        %976 = vmatprep.subr.mxu0 %v968
        %977 = vmatpush1.msra.mxu0 %v967
        %978 = vmatprep.subr.mxu0 %v966
        %979 = vmatpush1.msra.mxu0 %v965
        %980 = vmatprep.subr.mxu0 %v964
        %981 = vmatpush1.msra.mxu0 %v963
        %982 = vmatprep.subr.mxu0 %v962
        %983 = vmatpush1.msra.mxu0 %v961
        %984 = vmatprep.subr.mxu0 %v960
        %985 = vmatpush1.msra.mxu0 %v959
        %986 = vmatprep.subr.mxu0 %v958
        %987 = vmatpush1.msra.mxu0 %v957
        %988 = vmatprep.subr.mxu0 %v956
        %989 = vmatpush1.msra.mxu0 %v955
        %990 = vmatprep.subr.mxu0 %v954
        %991 = vmatpush1.msra.mxu0 %v953
        %992 = vmatprep.subr.mxu0 %v952
        %993 = vmatpush1.msra.mxu0 %v951
        %994 = vmatprep.subr.mxu0 %v950
        %995 = vmatpush1.msra.mxu0 %v949
        %996 = vmatprep.subr.mxu0 %v948
        %997 = vmatpush1.msra.mxu0 %v947
        %998 = vmatprep.subr.mxu0 %v946
        %999 = vmatpush1.msra.mxu0 %v945
        %1000 = vmatprep.subr.mxu0 %v944
        %1001 = vmatpush1.msra.mxu0 %v943
        %1002 = vmatprep.subr.mxu0 %v942
        %1003 = vmatpush1.msra.mxu0 %v941
        %1004 = vmatprep.subr.mxu0 %v940
        %1005 = vmatpush1.msra.mxu0 %v939
        %1006 = vmatprep.subr.mxu0 0.0
        %1007 = vmatpush2.msra.mxu0 0.0
        %1008 = vmatprep.subr.mxu0 0.0
        %1009 = vmatpush2.msra.mxu0 0.0
        %1010 = vmatprep.subr.mxu0 0.0
        %1011 = vmatpush2.msra.mxu0 0.0
        %1012 = vmatprep.subr.mxu0 0.0
        %1013 = vmatpush2.msra.mxu0 0.0
        %1014 = vmatprep.subr.mxu0 0.0
        %1015 = vmatpush2.msra.mxu0 0.0
        %1016 = vmatprep.subr.mxu0 0.0
        %1017 = vmatpush2.msra.mxu0 0.0
        %1018 = vmatprep.subr.mxu0 0.0
        %1019 = vmatpush2.msra.mxu0 0.0
        %1020 = vmatprep.subr.mxu0 0.0
        %1021 = vmatpush2.msra.mxu0 0.0
        %1022 = vmatprep.subr.mxu0 0.0
        %1023 = vmatpush2.msra.mxu0 0.0
        %1024 = vmatprep.subr.mxu0 0.0
        %1025 = vmatpush2.msra.mxu0 0.0
        %1026 = vmatprep.subr.mxu0 0.0
        %1027 = vmatpush2.msra.mxu0 0.0
        %1028 = vmatprep.subr.mxu0 0.0
        %1029 = vmatpush2.msra.mxu0 0.0
        %1030 = vmatprep.subr.mxu0 0.0
        %1031 = vmatpush2.msra.mxu0 0.0
        %1032 = vmatprep.subr.mxu0 0.0
        %1033 = vmatpush2.msra.mxu0 0.0
        %1034 = vmatprep.subr.mxu0 0.0
        %1035 = vmatpush2.msra.mxu0 0.0
        %1036 = vmatprep.subr.mxu0 0.0
        %1037 = vmatpush2.msra.mxu0 0.0
        %1038 = vmatprep.mubr.f32.mxu0 0.0
        %1039 = vmatmul.mubr.f32.gmra.mxu0 %v972
        %v1040 = vpop.f32.mrf.mxu0
        %v1041 = vadd.f32 0.0, %v1040
        %v1042 = vpop.f32.mrf.mxu0
        %v1043 = vadd.f32 0.0, %v1042
        %1044 = vdwg.mxu0
        %1045 = vmatprep.subr.mxu0 %v937
        %1046 = vmatpush1.msra.mxu0 %v936
        %1047 = vmatprep.subr.mxu0 %v935
        %1048 = vmatpush1.msra.mxu0 %v934
        %1049 = vmatprep.subr.mxu0 %v933
        %1050 = vmatpush1.msra.mxu0 %v932
        %1051 = vmatprep.subr.mxu0 %v931
        %1052 = vmatpush1.msra.mxu0 %v930
        %1053 = vmatprep.subr.mxu0 %v929
        %1054 = vmatpush1.msra.mxu0 %v928
        %1055 = vmatprep.subr.mxu0 %v927
        %1056 = vmatpush1.msra.mxu0 %v926
        %1057 = vmatprep.subr.mxu0 %v925
        %1058 = vmatpush1.msra.mxu0 %v924
        %1059 = vmatprep.subr.mxu0 %v923
        %1060 = vmatpush1.msra.mxu0 %v922
        %1061 = vmatprep.subr.mxu0 %v921
        %1062 = vmatpush1.msra.mxu0 %v920
        %1063 = vmatprep.subr.mxu0 %v919
        %1064 = vmatpush1.msra.mxu0 %v918
        %1065 = vmatprep.subr.mxu0 %v917
        %1066 = vmatpush1.msra.mxu0 %v916
        %1067 = vmatprep.subr.mxu0 %v915
        %1068 = vmatpush1.msra.mxu0 %v914
        %1069 = vmatprep.subr.mxu0 %v913
        %1070 = vmatpush1.msra.mxu0 %v912
        %1071 = vmatprep.subr.mxu0 %v911
        %1072 = vmatpush1.msra.mxu0 %v910
        %1073 = vmatprep.subr.mxu0 %v909
        %1074 = vmatpush1.msra.mxu0 %v908
        %1075 = vmatprep.subr.mxu0 %v907
        %1076 = vmatpush1.msra.mxu0 %v906
        %1077 = vmatprep.subr.mxu0 0.0
        %1078 = vmatpush2.msra.mxu0 0.0
        %1079 = vmatprep.subr.mxu0 0.0
        %1080 = vmatpush2.msra.mxu0 0.0
        %1081 = vmatprep.subr.mxu0 0.0
        %1082 = vmatpush2.msra.mxu0 0.0
        %1083 = vmatprep.subr.mxu0 0.0
        %1084 = vmatpush2.msra.mxu0 0.0
        %1085 = vmatprep.subr.mxu0 0.0
        %1086 = vmatpush2.msra.mxu0 0.0
        %1087 = vmatprep.subr.mxu0 0.0
        %1088 = vmatpush2.msra.mxu0 0.0
        %1089 = vmatprep.subr.mxu0 0.0
        %1090 = vmatpush2.msra.mxu0 0.0
        %1091 = vmatprep.subr.mxu0 0.0
        %1092 = vmatpush2.msra.mxu0 0.0
        %1093 = vmatprep.subr.mxu0 0.0
        %1094 = vmatpush2.msra.mxu0 0.0
        %1095 = vmatprep.subr.mxu0 0.0
        %1096 = vmatpush2.msra.mxu0 0.0
        %1097 = vmatprep.subr.mxu0 0.0
        %1098 = vmatpush2.msra.mxu0 0.0
        %1099 = vmatprep.subr.mxu0 0.0
        %1100 = vmatpush2.msra.mxu0 0.0
        %1101 = vmatprep.subr.mxu0 0.0
        %1102 = vmatpush2.msra.mxu0 0.0
        %1103 = vmatprep.subr.mxu0 0.0
        %1104 = vmatpush2.msra.mxu0 0.0
        %1105 = vmatprep.subr.mxu0 0.0
        %1106 = vmatpush2.msra.mxu0 0.0
        %1107 = vmatprep.subr.mxu0 0.0
        %1108 = vmatpush2.msra.mxu0 0.0
        %1109 = vmatprep.mubr.f32.mxu0 0.0
        %1110 = vmatmul.mubr.f32.gmra.mxu0 %v905
        %v1111 = vpop.f32.mrf.mxu0
        %v1112 = vadd.f32 %v1041, %v1111
        %v1113 = vpop.f32.mrf.mxu0
        %v1114 = vadd.f32 %v1043, %v1113
        %1115 = vdwg.mxu0
        %s1116 = scalar_lea.vmem %s2, 512
        %v1117 = vld [vmem:[%s1116] sm:$0xff]
        %v1118 = vld [vmem:[%s1116 + $0x8] sm:$0xff]
        %v1119 = vld [vmem:[%s1116 + $0x10] sm:$0xff]
        %v1120 = vld [vmem:[%s1116 + $0x18] sm:$0xff]
        %v1121 = vld [vmem:[%s1116 + $0x20] sm:$0xff]
        %v1122 = vld [vmem:[%s1116 + $0x28] sm:$0xff]
        %v1123 = vld [vmem:[%s1116 + $0x30] sm:$0xff]
        %v1124 = vld [vmem:[%s1116 + $0x38] sm:$0xff]
        %v1125 = vld [vmem:[%s1116 + $0x40] sm:$0xff]
        %v1126 = vld [vmem:[%s1116 + $0x48] sm:$0xff]
        %v1127 = vld [vmem:[%s1116 + $0x50] sm:$0xff]
        %v1128 = vld [vmem:[%s1116 + $0x58] sm:$0xff]
        %v1129 = vld [vmem:[%s1116 + $0x60] sm:$0xff]
        %v1130 = vld [vmem:[%s1116 + $0x68] sm:$0xff]
        %v1131 = vld [vmem:[%s1116 + $0x70] sm:$0xff]
        %v1132 = vld [vmem:[%s1116 + $0x78] sm:$0xff]
        %v1133 = vld [vmem:[%s1116 + $0x80] sm:$0xff]
        %v1134 = vld [vmem:[%s1116 + $0x88] sm:$0xff]
        %v1135 = vld [vmem:[%s1116 + $0x90] sm:$0xff]
        %v1136 = vld [vmem:[%s1116 + $0x98] sm:$0xff]
        %v1137 = vld [vmem:[%s1116 + $0xa0] sm:$0xff]
        %v1138 = vld [vmem:[%s1116 + $0xa8] sm:$0xff]
        %v1139 = vld [vmem:[%s1116 + $0xb0] sm:$0xff]
        %v1140 = vld [vmem:[%s1116 + $0xb8] sm:$0xff]
        %v1141 = vld [vmem:[%s1116 + $0xc0] sm:$0xff]
        %v1142 = vld [vmem:[%s1116 + $0xc8] sm:$0xff]
        %v1143 = vld [vmem:[%s1116 + $0xd0] sm:$0xff]
        %v1144 = vld [vmem:[%s1116 + $0xd8] sm:$0xff]
        %v1145 = vld [vmem:[%s1116 + $0xe0] sm:$0xff]
        %v1146 = vld [vmem:[%s1116 + $0xe8] sm:$0xff]
        %v1147 = vld [vmem:[%s1116 + $0xf0] sm:$0xff]
        %v1148 = vld [vmem:[%s1116 + $0xf8] sm:$0xff]
        %v1149 = vrot.slane %v905, 2
        %1151 = vmatprep.subr.mxu0 %v1148
        %1152 = vmatpush1.msra.mxu0 %v1147
        %1153 = vmatprep.subr.mxu0 %v1146
        %1154 = vmatpush1.msra.mxu0 %v1145
        %1155 = vmatprep.subr.mxu0 %v1144
        %1156 = vmatpush1.msra.mxu0 %v1143
        %1157 = vmatprep.subr.mxu0 %v1142
        %1158 = vmatpush1.msra.mxu0 %v1141
        %1159 = vmatprep.subr.mxu0 %v1140
        %1160 = vmatpush1.msra.mxu0 %v1139
        %1161 = vmatprep.subr.mxu0 %v1138
        %1162 = vmatpush1.msra.mxu0 %v1137
        %1163 = vmatprep.subr.mxu0 %v1136
        %1164 = vmatpush1.msra.mxu0 %v1135
        %1165 = vmatprep.subr.mxu0 %v1134
        %1166 = vmatpush1.msra.mxu0 %v1133
        %1167 = vmatprep.subr.mxu0 %v1132
        %1168 = vmatpush1.msra.mxu0 %v1131
        %1169 = vmatprep.subr.mxu0 %v1130
        %1170 = vmatpush1.msra.mxu0 %v1129
        %1171 = vmatprep.subr.mxu0 %v1128
        %1172 = vmatpush1.msra.mxu0 %v1127
        %1173 = vmatprep.subr.mxu0 %v1126
        %1174 = vmatpush1.msra.mxu0 %v1125
        %1175 = vmatprep.subr.mxu0 %v1124
        %1176 = vmatpush1.msra.mxu0 %v1123
        %1177 = vmatprep.subr.mxu0 %v1122
        %1178 = vmatpush1.msra.mxu0 %v1121
        %1179 = vmatprep.subr.mxu0 %v1120
        %1180 = vmatpush1.msra.mxu0 %v1119
        %1181 = vmatprep.subr.mxu0 %v1118
        %1182 = vmatpush1.msra.mxu0 %v1117
        %1183 = vmatprep.subr.mxu0 0.0
        %1184 = vmatpush2.msra.mxu0 0.0
        %1185 = vmatprep.subr.mxu0 0.0
        %1186 = vmatpush2.msra.mxu0 0.0
        %1187 = vmatprep.subr.mxu0 0.0
        %1188 = vmatpush2.msra.mxu0 0.0
        %1189 = vmatprep.subr.mxu0 0.0
        %1190 = vmatpush2.msra.mxu0 0.0
        %1191 = vmatprep.subr.mxu0 0.0
        %1192 = vmatpush2.msra.mxu0 0.0
        %1193 = vmatprep.subr.mxu0 0.0
        %1194 = vmatpush2.msra.mxu0 0.0
        %1195 = vmatprep.subr.mxu0 0.0
        %1196 = vmatpush2.msra.mxu0 0.0
        %1197 = vmatprep.subr.mxu0 0.0
        %1198 = vmatpush2.msra.mxu0 0.0
        %1199 = vmatprep.subr.mxu0 0.0
        %1200 = vmatpush2.msra.mxu0 0.0
        %1201 = vmatprep.subr.mxu0 0.0
        %1202 = vmatpush2.msra.mxu0 0.0
        %1203 = vmatprep.subr.mxu0 0.0
        %1204 = vmatpush2.msra.mxu0 0.0
        %1205 = vmatprep.subr.mxu0 0.0
        %1206 = vmatpush2.msra.mxu0 0.0
        %1207 = vmatprep.subr.mxu0 0.0
        %1208 = vmatpush2.msra.mxu0 0.0
        %1209 = vmatprep.subr.mxu0 0.0
        %1210 = vmatpush2.msra.mxu0 0.0
        %1211 = vmatprep.subr.mxu0 0.0
        %1212 = vmatpush2.msra.mxu0 0.0
        %1213 = vmatprep.subr.mxu0 0.0
        %1214 = vmatpush2.msra.mxu0 0.0
        %1215 = vmatprep.mubr.f32.mxu0 0.0
        %1216 = vmatmul.mubr.f32.gmra.mxu0 %v1149
        %v1217 = vpop.f32.mrf.mxu0
        %v1218 = vadd.f32 0.0, %v1217
        %v1219 = vpop.f32.mrf.mxu0
        %v1220 = vadd.f32 0.0, %v1219
        %1221 = vdwg.mxu0
        %v1222 = vadd.f32 %v1112, %v1218
        %v1223 = vadd.f32 %v1114, %v1220
        %v1226 = vrot.slane %v1222, 1
        %v1227 = vrot.slane %v1223, 1
        %v1230 = vmax.f32 %v1222, %v1226
        %v1231 = vmax.f32 %v1223, %v1227
        %v1232 = vmax.f32 %v1230, %v1231
        %v1233 = vld [vmem:[%s4] sm:$0x1]
        %v1234 = vadd.f32 %v1232, %v1233
        %v1235 = vmax.f32 %v1234, 0.0
        %v1237 = vlaneseq
        %v1238 = vshrl.u32 %v1237, 7
        %v1239 = vsub.s32 0, %v1238
        %v1240 = vrot.slane %v1233, %v1239
        %v1242 = vadd.f32 %v1232, %v1240
        %v1243 = vmax.f32 %v1242, 0.0
        %v1244 = vld [vmem:[%s5] sm:$0xff]
        %v1245 = vld [vmem:[%s5 + $0x8] sm:$0xff]
        %v1246 = vld [vmem:[%s5 + $0x10] sm:$0xff]
        %v1247 = vld [vmem:[%s5 + $0x18] sm:$0xff]
        %v1248 = vld [vmem:[%s5 + $0x20] sm:$0xff]
        %v1249 = vld [vmem:[%s5 + $0x28] sm:$0xff]
        %v1250 = vld [vmem:[%s5 + $0x30] sm:$0xff]
        %v1251 = vld [vmem:[%s5 + $0x38] sm:$0xff]
        %v1252 = vld [vmem:[%s5 + $0x40] sm:$0xff]
        %v1253 = vld [vmem:[%s5 + $0x48] sm:$0xff]
        %v1254 = vld [vmem:[%s5 + $0x50] sm:$0xff]
        %v1255 = vld [vmem:[%s5 + $0x58] sm:$0xff]
        %v1256 = vld [vmem:[%s5 + $0x60] sm:$0xff]
        %v1257 = vld [vmem:[%s5 + $0x68] sm:$0xff]
        %v1258 = vld [vmem:[%s5 + $0x70] sm:$0xff]
        %v1259 = vld [vmem:[%s5 + $0x78] sm:$0xff]
        %v1260 = vld [vmem:[%s6] sm:$0xff]
        %v1261 = vld [vmem:[%s6 + $0x8] sm:$0xff]
        %v1262 = vld [vmem:[%s6 + $0x10] sm:$0xff]
        %v1263 = vld [vmem:[%s6 + $0x18] sm:$0xff]
        %v1264 = vld [vmem:[%s6 + $0x20] sm:$0xff]
        %v1265 = vld [vmem:[%s6 + $0x28] sm:$0xff]
        %v1266 = vld [vmem:[%s6 + $0x30] sm:$0xff]
        %v1267 = vld [vmem:[%s6 + $0x38] sm:$0xff]
        %v1268 = vld [vmem:[%s6 + $0x40] sm:$0xff]
        %v1269 = vld [vmem:[%s6 + $0x48] sm:$0xff]
        %v1270 = vld [vmem:[%s6 + $0x50] sm:$0xff]
        %v1271 = vld [vmem:[%s6 + $0x58] sm:$0xff]
        %v1272 = vld [vmem:[%s6 + $0x60] sm:$0xff]
        %v1273 = vld [vmem:[%s6 + $0x68] sm:$0xff]
        %v1274 = vld [vmem:[%s6 + $0x70] sm:$0xff]
        %v1275 = vld [vmem:[%s6 + $0x78] sm:$0xff]
        %v1277 = vrot.slane %v1243, 2
        %1279 = vmatprep.subr.mxu0 0.0
        %1280 = vmatpush1.msra.mxu0 %v1275
        %1281 = vmatprep.subr.mxu0 0.0
        %1282 = vmatpush1.msra.mxu0 %v1274
        %1283 = vmatprep.subr.mxu0 0.0
        %1284 = vmatpush1.msra.mxu0 %v1273
        %1285 = vmatprep.subr.mxu0 0.0
        %1286 = vmatpush1.msra.mxu0 %v1272
        %1287 = vmatprep.subr.mxu0 0.0
        %1288 = vmatpush1.msra.mxu0 %v1271
        %1289 = vmatprep.subr.mxu0 0.0
        %1290 = vmatpush1.msra.mxu0 %v1270
        %1291 = vmatprep.subr.mxu0 0.0
        %1292 = vmatpush1.msra.mxu0 %v1269
        %1293 = vmatprep.subr.mxu0 0.0
        %1294 = vmatpush1.msra.mxu0 %v1268
        %1295 = vmatprep.subr.mxu0 0.0
        %1296 = vmatpush1.msra.mxu0 %v1267
        %1297 = vmatprep.subr.mxu0 0.0
        %1298 = vmatpush1.msra.mxu0 %v1266
        %1299 = vmatprep.subr.mxu0 0.0
        %1300 = vmatpush1.msra.mxu0 %v1265
        %1301 = vmatprep.subr.mxu0 0.0
        %1302 = vmatpush1.msra.mxu0 %v1264
        %1303 = vmatprep.subr.mxu0 0.0
        %1304 = vmatpush1.msra.mxu0 %v1263
        %1305 = vmatprep.subr.mxu0 0.0
        %1306 = vmatpush1.msra.mxu0 %v1262
        %1307 = vmatprep.subr.mxu0 0.0
        %1308 = vmatpush1.msra.mxu0 %v1261
        %1309 = vmatprep.subr.mxu0 0.0
        %1310 = vmatpush1.msra.mxu0 %v1260
        %1311 = vmatprep.subr.mxu0 0.0
        %1312 = vmatpush2.msra.mxu0 0.0
        %1313 = vmatprep.subr.mxu0 0.0
        %1314 = vmatpush2.msra.mxu0 0.0
        %1315 = vmatprep.subr.mxu0 0.0
        %1316 = vmatpush2.msra.mxu0 0.0
        %1317 = vmatprep.subr.mxu0 0.0
        %1318 = vmatpush2.msra.mxu0 0.0
        %1319 = vmatprep.subr.mxu0 0.0
        %1320 = vmatpush2.msra.mxu0 0.0
        %1321 = vmatprep.subr.mxu0 0.0
        %1322 = vmatpush2.msra.mxu0 0.0
        %1323 = vmatprep.subr.mxu0 0.0
        %1324 = vmatpush2.msra.mxu0 0.0
        %1325 = vmatprep.subr.mxu0 0.0
        %1326 = vmatpush2.msra.mxu0 0.0
        %1327 = vmatprep.subr.mxu0 0.0
        %1328 = vmatpush2.msra.mxu0 0.0
        %1329 = vmatprep.subr.mxu0 0.0
        %1330 = vmatpush2.msra.mxu0 0.0
        %1331 = vmatprep.subr.mxu0 0.0
        %1332 = vmatpush2.msra.mxu0 0.0
        %1333 = vmatprep.subr.mxu0 0.0
        %1334 = vmatpush2.msra.mxu0 0.0
        %1335 = vmatprep.subr.mxu0 0.0
        %1336 = vmatpush2.msra.mxu0 0.0
        %1337 = vmatprep.subr.mxu0 0.0
        %1338 = vmatpush2.msra.mxu0 0.0
        %1339 = vmatprep.subr.mxu0 0.0
        %1340 = vmatpush2.msra.mxu0 0.0
        %1341 = vmatprep.subr.mxu0 0.0
        %1342 = vmatpush2.msra.mxu0 0.0
        %1343 = vmatprep.mubr.f32.mxu0 0.0
        %1344 = vmatmul.mubr.f32.gmra.mxu0 %v1277
        %v1345 = vpop.f32.mrf.mxu0
        %v1346 = vadd.f32 0.0, %v1345
        %v1347 = vpop.f32.mrf.mxu0
        %1348 = vdwg.mxu0
        %1349 = vmatprep.subr.mxu0 0.0
        %1350 = vmatpush1.msra.mxu0 %v1259
        %1351 = vmatprep.subr.mxu0 0.0
        %1352 = vmatpush1.msra.mxu0 %v1258
        %1353 = vmatprep.subr.mxu0 0.0
        %1354 = vmatpush1.msra.mxu0 %v1257
        %1355 = vmatprep.subr.mxu0 0.0
        %1356 = vmatpush1.msra.mxu0 %v1256
        %1357 = vmatprep.subr.mxu0 0.0
        %1358 = vmatpush1.msra.mxu0 %v1255
        %1359 = vmatprep.subr.mxu0 0.0
        %1360 = vmatpush1.msra.mxu0 %v1254
        %1361 = vmatprep.subr.mxu0 0.0
        %1362 = vmatpush1.msra.mxu0 %v1253
        %1363 = vmatprep.subr.mxu0 0.0
        %1364 = vmatpush1.msra.mxu0 %v1252
        %1365 = vmatprep.subr.mxu0 0.0
        %1366 = vmatpush1.msra.mxu0 %v1251
        %1367 = vmatprep.subr.mxu0 0.0
        %1368 = vmatpush1.msra.mxu0 %v1250
        %1369 = vmatprep.subr.mxu0 0.0
        %1370 = vmatpush1.msra.mxu0 %v1249
        %1371 = vmatprep.subr.mxu0 0.0
        %1372 = vmatpush1.msra.mxu0 %v1248
        %1373 = vmatprep.subr.mxu0 0.0
        %1374 = vmatpush1.msra.mxu0 %v1247
        %1375 = vmatprep.subr.mxu0 0.0
        %1376 = vmatpush1.msra.mxu0 %v1246
        %1377 = vmatprep.subr.mxu0 0.0
        %1378 = vmatpush1.msra.mxu0 %v1245
        %1379 = vmatprep.subr.mxu0 0.0
        %1380 = vmatpush1.msra.mxu0 %v1244
        %1381 = vmatprep.subr.mxu0 0.0
        %1382 = vmatpush2.msra.mxu0 0.0
        %1383 = vmatprep.subr.mxu0 0.0
        %1384 = vmatpush2.msra.mxu0 0.0
        %1385 = vmatprep.subr.mxu0 0.0
        %1386 = vmatpush2.msra.mxu0 0.0
        %1387 = vmatprep.subr.mxu0 0.0
        %1388 = vmatpush2.msra.mxu0 0.0
        %1389 = vmatprep.subr.mxu0 0.0
        %1390 = vmatpush2.msra.mxu0 0.0
        %1391 = vmatprep.subr.mxu0 0.0
        %1392 = vmatpush2.msra.mxu0 0.0
        %1393 = vmatprep.subr.mxu0 0.0
        %1394 = vmatpush2.msra.mxu0 0.0
        %1395 = vmatprep.subr.mxu0 0.0
        %1396 = vmatpush2.msra.mxu0 0.0
        %1397 = vmatprep.subr.mxu0 0.0
        %1398 = vmatpush2.msra.mxu0 0.0
        %1399 = vmatprep.subr.mxu0 0.0
        %1400 = vmatpush2.msra.mxu0 0.0
        %1401 = vmatprep.subr.mxu0 0.0
        %1402 = vmatpush2.msra.mxu0 0.0
        %1403 = vmatprep.subr.mxu0 0.0
        %1404 = vmatpush2.msra.mxu0 0.0
        %1405 = vmatprep.subr.mxu0 0.0
        %1406 = vmatpush2.msra.mxu0 0.0
        %1407 = vmatprep.subr.mxu0 0.0
        %1408 = vmatpush2.msra.mxu0 0.0
        %1409 = vmatprep.subr.mxu0 0.0
        %1410 = vmatpush2.msra.mxu0 0.0
        %1411 = vmatprep.subr.mxu0 0.0
        %1412 = vmatpush2.msra.mxu0 0.0
        %1413 = vmatprep.mubr.f32.mxu0 0.0
        %1414 = vmatmul.mubr.f32.gmra.mxu0 %v1235
        %v1415 = vpop.f32.mrf.mxu0
        %v1416 = vadd.f32 %v1346, %v1415
        %v1417 = vpop.f32.mrf.mxu0
        %1418 = vdwg.mxu0
        %v1419 = vld [vmem:[%s7] sm:$0x1]
        %v1420 = vadd.f32 %v1416, %v1419
        %v1421 = vmax.f32 %v1420, 0.0
        %v1422 = vld [vmem:[%s8] sm:$0xff]
        %v1423 = vld [vmem:[%s8 + $0x8] sm:$0xff]
        %v1424 = vld [vmem:[%s8 + $0x10] sm:$0xff]
        %v1425 = vld [vmem:[%s8 + $0x18] sm:$0xff]
        %v1426 = vld [vmem:[%s8 + $0x20] sm:$0xff]
        %v1427 = vld [vmem:[%s8 + $0x28] sm:$0xff]
        %v1428 = vld [vmem:[%s8 + $0x30] sm:$0xff]
        %v1429 = vld [vmem:[%s8 + $0x38] sm:$0xff]
        %v1430 = vld [vmem:[%s8 + $0x40] sm:$0xff]
        %v1431 = vld [vmem:[%s8 + $0x48] sm:$0xff]
        %v1432 = vld [vmem:[%s8 + $0x50] sm:$0xff]
        %v1433 = vld [vmem:[%s8 + $0x58] sm:$0xff]
        %v1434 = vld [vmem:[%s8 + $0x60] sm:$0xff]
        %v1435 = vld [vmem:[%s8 + $0x68] sm:$0xff]
        %v1436 = vld [vmem:[%s8 + $0x70] sm:$0xff]
        %v1437 = vld [vmem:[%s8 + $0x78] sm:$0xff]
        %v1438 = vld [vmem:[%s9] sm:$0x1]
        %1439 = vmatprep.subr.mxu0 0.0
        %1440 = vmatpush1.msra.mxu0 %v1437
        %1441 = vmatprep.subr.mxu0 0.0
        %1442 = vmatpush1.msra.mxu0 %v1436
        %1443 = vmatprep.subr.mxu0 0.0
        %1444 = vmatpush1.msra.mxu0 %v1435
        %1445 = vmatprep.subr.mxu0 0.0
        %1446 = vmatpush1.msra.mxu0 %v1434
        %1447 = vmatprep.subr.mxu0 0.0
        %1448 = vmatpush1.msra.mxu0 %v1433
        %1449 = vmatprep.subr.mxu0 0.0
        %1450 = vmatpush1.msra.mxu0 %v1432
        %1451 = vmatprep.subr.mxu0 0.0
        %1452 = vmatpush1.msra.mxu0 %v1431
        %1453 = vmatprep.subr.mxu0 0.0
        %1454 = vmatpush1.msra.mxu0 %v1430
        %1455 = vmatprep.subr.mxu0 0.0
        %1456 = vmatpush1.msra.mxu0 %v1429
        %1457 = vmatprep.subr.mxu0 0.0
        %1458 = vmatpush1.msra.mxu0 %v1428
        %1459 = vmatprep.subr.mxu0 0.0
        %1460 = vmatpush1.msra.mxu0 %v1427
        %1461 = vmatprep.subr.mxu0 0.0
        %1462 = vmatpush1.msra.mxu0 %v1426
        %1463 = vmatprep.subr.mxu0 0.0
        %1464 = vmatpush1.msra.mxu0 %v1425
        %1465 = vmatprep.subr.mxu0 0.0
        %1466 = vmatpush1.msra.mxu0 %v1424
        %1467 = vmatprep.subr.mxu0 0.0
        %1468 = vmatpush1.msra.mxu0 %v1423
        %1469 = vmatprep.subr.mxu0 0.0
        %1470 = vmatpush1.msra.mxu0 %v1422
        %1471 = vmatprep.subr.mxu0 0.0
        %1472 = vmatpush2.msra.mxu0 0.0
        %1473 = vmatprep.subr.mxu0 0.0
        %1474 = vmatpush2.msra.mxu0 0.0
        %1475 = vmatprep.subr.mxu0 0.0
        %1476 = vmatpush2.msra.mxu0 0.0
        %1477 = vmatprep.subr.mxu0 0.0
        %1478 = vmatpush2.msra.mxu0 0.0
        %1479 = vmatprep.subr.mxu0 0.0
        %1480 = vmatpush2.msra.mxu0 0.0
        %1481 = vmatprep.subr.mxu0 0.0
        %1482 = vmatpush2.msra.mxu0 0.0
        %1483 = vmatprep.subr.mxu0 0.0
        %1484 = vmatpush2.msra.mxu0 0.0
        %1485 = vmatprep.subr.mxu0 0.0
        %1486 = vmatpush2.msra.mxu0 0.0
        %1487 = vmatprep.subr.mxu0 0.0
        %1488 = vmatpush2.msra.mxu0 0.0
        %1489 = vmatprep.subr.mxu0 0.0
        %1490 = vmatpush2.msra.mxu0 0.0
        %1491 = vmatprep.subr.mxu0 0.0
        %1492 = vmatpush2.msra.mxu0 0.0
        %1493 = vmatprep.subr.mxu0 0.0
        %1494 = vmatpush2.msra.mxu0 0.0
        %1495 = vmatprep.subr.mxu0 0.0
        %1496 = vmatpush2.msra.mxu0 0.0
        %1497 = vmatprep.subr.mxu0 0.0
        %1498 = vmatpush2.msra.mxu0 0.0
        %1499 = vmatprep.subr.mxu0 0.0
        %1500 = vmatpush2.msra.mxu0 0.0
        %1501 = vmatprep.subr.mxu0 0.0
        %1502 = vmatpush2.msra.mxu0 0.0
        %1503 = vmatprep.mubr.f32.mxu0 0.0
        %1504 = vmatmul.mubr.f32.gmra.mxu0 %v1421
        %v1505 = vpop.f32.mrf.mxu0
        %v1506 = vadd.f32 %v1438, %v1505
        %v1507 = vpop.f32.mrf.mxu0
        %1508 = vdwg.mxu0
        %v1509 = vmax.f32 %v1506, 0.0
        %v1510 = vld [vmem:[%s10] sm:$0xff]
        %v1511 = vld [vmem:[%s10 + $0x8] sm:$0xff]
        %v1512 = vld [vmem:[%s10 + $0x10] sm:$0xff]
        %v1513 = vld [vmem:[%s10 + $0x18] sm:$0xff]
        %v1514 = vld [vmem:[%s10 + $0x20] sm:$0xff]
        %v1515 = vld [vmem:[%s10 + $0x28] sm:$0xff]
        %v1516 = vld [vmem:[%s10 + $0x30] sm:$0xff]
        %v1517 = vld [vmem:[%s10 + $0x38] sm:$0xff]
        %v1518 = vld [vmem:[%s11] sm:$0x1]
        %vm1519 = vcmask 523264
        %v1521 = vsel %vm1519, %v1509, 0
        %1523 = vmatprep.subr.mxu0 0.0
        %1524 = vmatpush1.msra.mxu0 0.0
        %1525 = vmatprep.subr.mxu0 0.0
        %1526 = vmatpush1.msra.mxu0 0.0
        %1527 = vmatprep.subr.mxu0 0.0
        %1528 = vmatpush1.msra.mxu0 0.0
        %1529 = vmatprep.subr.mxu0 0.0
        %1530 = vmatpush1.msra.mxu0 0.0
        %1531 = vmatprep.subr.mxu0 0.0
        %1532 = vmatpush1.msra.mxu0 0.0
        %1533 = vmatprep.subr.mxu0 0.0
        %1534 = vmatpush1.msra.mxu0 0.0
        %1535 = vmatprep.subr.mxu0 0.0
        %1536 = vmatpush1.msra.mxu0 0.0
        %1537 = vmatprep.subr.mxu0 0.0
        %1538 = vmatpush1.msra.mxu0 0.0
        %1539 = vmatprep.subr.mxu0 0.0
        %1540 = vmatpush1.msra.mxu0 %v1517
        %1541 = vmatprep.subr.mxu0 0.0
        %1542 = vmatpush1.msra.mxu0 %v1516
        %1543 = vmatprep.subr.mxu0 0.0
        %1544 = vmatpush1.msra.mxu0 %v1515
        %1545 = vmatprep.subr.mxu0 0.0
        %1546 = vmatpush1.msra.mxu0 %v1514
        %1547 = vmatprep.subr.mxu0 0.0
        %1548 = vmatpush1.msra.mxu0 %v1513
        %1549 = vmatprep.subr.mxu0 0.0
        %1550 = vmatpush1.msra.mxu0 %v1512
        %1551 = vmatprep.subr.mxu0 0.0
        %1552 = vmatpush1.msra.mxu0 %v1511
        %1553 = vmatprep.subr.mxu0 0.0
        %1554 = vmatpush1.msra.mxu0 %v1510
        %1555 = vmatprep.subr.mxu0 0.0
        %1556 = vmatpush2.msra.mxu0 0.0
        %1557 = vmatprep.subr.mxu0 0.0
        %1558 = vmatpush2.msra.mxu0 0.0
        %1559 = vmatprep.subr.mxu0 0.0
        %1560 = vmatpush2.msra.mxu0 0.0
        %1561 = vmatprep.subr.mxu0 0.0
        %1562 = vmatpush2.msra.mxu0 0.0
        %1563 = vmatprep.subr.mxu0 0.0
        %1564 = vmatpush2.msra.mxu0 0.0
        %1565 = vmatprep.subr.mxu0 0.0
        %1566 = vmatpush2.msra.mxu0 0.0
        %1567 = vmatprep.subr.mxu0 0.0
        %1568 = vmatpush2.msra.mxu0 0.0
        %1569 = vmatprep.subr.mxu0 0.0
        %1570 = vmatpush2.msra.mxu0 0.0
        %1571 = vmatprep.subr.mxu0 0.0
        %1572 = vmatpush2.msra.mxu0 0.0
        %1573 = vmatprep.subr.mxu0 0.0
        %1574 = vmatpush2.msra.mxu0 0.0
        %1575 = vmatprep.subr.mxu0 0.0
        %1576 = vmatpush2.msra.mxu0 0.0
        %1577 = vmatprep.subr.mxu0 0.0
        %1578 = vmatpush2.msra.mxu0 0.0
        %1579 = vmatprep.subr.mxu0 0.0
        %1580 = vmatpush2.msra.mxu0 0.0
        %1581 = vmatprep.subr.mxu0 0.0
        %1582 = vmatpush2.msra.mxu0 0.0
        %1583 = vmatprep.subr.mxu0 0.0
        %1584 = vmatpush2.msra.mxu0 0.0
        %1585 = vmatprep.subr.mxu0 0.0
        %1586 = vmatpush2.msra.mxu0 0.0
        %1587 = vmatprep.mubr.f32.mxu0 0.0
        %1588 = vmatmul.mubr.f32.gmra.mxu0 %v1521
        %v1589 = vpop.f32.mrf.mxu0
        %v1590 = vadd.f32 %v1518, %v1589
        %v1591 = vpop.f32.mrf.mxu0
        %1592 = vdwg.mxu0
        %vm1593 = vcmask 73728
        %v1594 = vsel %vm1593, %v1590, -inf
        %1595 = vmax.xlane.f32.xlu0 %v1594
        %v1596 = vpop.xlane.xlu0 %1595
        %v1597 = vsub.f32 %v1590, %v1596
        %v1598 = vmul.f32 %v1597, 1.442695
        %v1599 = vpow.pop %v1598
        %v1600 = vsel %vm1593, %v1599, 0.0
        %1601 = vadd.xlane.f32.xlu0 %v1600
        %v1602 = vpop.xlane.xlu0 %1601
        %v1603 = vrcp.pop %v1602
        %v1604 = vmul.f32 %v1599, %v1603
        %1605 = vst.msk [vmem:[%s405] sm:$0x1] %vm1593, %v1604
        %s1606 = sand.u32 %s291, 1
        %s1607 = scalar_lea.sflag [#allocation3], %s1606
        %s1608 = sand.u32 %s291, 1
        %s1609 = scalar_lea.vmem [#allocation2], %s1608
        // Predicated region
        $region69: #{example_net_forward.1} parent=67 // pred_check
          %p1610 = pneg %p301
        $region70: #{example_net_forward.1} parent=67 // pred_check_branch
          %1612 = sbr.rel (%p1610) target = $region72
        $region71: #{example_net_forward.1} parent=67 // pred_region
          %s1614 = ssub.s32 16, 16
          %1615 = vsyncadd %s1607, %s1614
          %s1616 = smul.addr %s26, 16
          %s1617 = scalar_lea.hbm %s12, %s1616
          %s1619 = sshll.u32 %s1609, 4
          %s1620 = int_to_ptr.vmem [resolvable:$true] %s1619
          %1622 = dma.vmem_to_hbm [thread:$0]  %s1620, 16, %s1617, %s1607
        $region72: #{example_net_forward.1} parent=67 // pred_fallthru
          _
      $region68: #{example_net_forward.1} parent=5 // pred_fallthru
        _
      %p1623 = scmp.le.s32.totalorder 2, %s21
      // Predicated region
      $region73: #{example_net_forward.1} parent=5 // pred_check
        %p1624 = pneg %p1623
      $region74: #{example_net_forward.1} parent=5 // pred_check_branch
        %1626 = sbr.rel (%p1624) target = $region76
      $region75: #{example_net_forward.1} parent=5 // pred_region
        %s1627 = ssub.s32 %s21, 2
        // Predicated region
        $region77: #{example_net_forward.1} parent=75 // pred_check
          %p1628 = pneg %p307
        $region78: #{example_net_forward.1} parent=75 // pred_check_branch
          %1630 = sbr.rel (%p1628) target = $region80
        $region79: #{example_net_forward.1} parent=75 // pred_region
          %s1631 = sand.u32 %s292, 1
          %s1632 = scalar_lea.sflag [#allocation3], %s1631
          %s1633 = sand.u32 %s292, 1
          %s1634 = scalar_lea.vmem [#allocation2], %s1633
          %1635 = dma.done %s1632, 16
        $region80: #{example_net_forward.1} parent=75 // pred_fallthru
          _
      $region76: #{example_net_forward.1} parent=5 // pred_fallthru
        _
    $region6: #{example_net_forward.1} parent=1 // loop_footer
      %s25 = sadd.s32 1, %s21
    $region7: #{example_net_forward.1} parent=1 // loop_footer_branch
      %20 = sbr.rel target = $region3
    $region8: #{example_net_forward.1} parent=1 // loop_exit
      _
    %1636 = vsyncpa [#allocation3], 1
    %s1637 = scalar_lea.sflag [#allocation3], 1
    %1638 = vsyncpa %s1637, 1

</llo_original>
